<compile_context>
chip_gen: v6e
topology: v6e:2x2x1
jax: 0.10.0
libtpu: 0.0.40
codegen_flags: <defaults>
</compile_context>

<pallas_src>
import jax
import jax.numpy as jnp
from jax.experimental import pallas as pl
from jax.experimental.pallas import tpu as pltpu


def _conv1x1_pixel_kernel(w_ref, x_ref, b_ref, o_ref):
    # w_ref: (1, C)   x_ref: (C, TM)   b_ref: (1,) SMEM   o_ref: (1, TM)
    acc = jnp.dot(w_ref[...], x_ref[...], preferred_element_type=jnp.float32)
    o_ref[...] = (acc + b_ref[0]).astype(o_ref.dtype)


def _make_batched_kernel(nb):
    def kernel(w_ref, x_ref, b_ref, o_ref):
        # w_ref: (1, C)   x_ref: (NB, C, HW)   b_ref: (1,) SMEM   o_ref: (NB, 1, HW)
        w = w_ref[...]
        b = b_ref[0]
        for i in range(nb):  # NB is a small static int -> short unrolled matvec loop
            acc = jnp.dot(w, x_ref[i], preferred_element_type=jnp.float32)
            o_ref[i] = (acc + b).astype(o_ref.dtype)
    return kernel


def conv1x1_nchw(x_nchw, weight, bias, *, tm=1024,
                 vmem_limit_bytes=32 * 1024 * 1024):
    """1x1 conv: x (N, C, H, W), weight (1, C, 1, 1), bias (1,) -> (N, 1, H, W)."""
    N, C, H, W = x_nchw.shape
    HW = H * W

    # NCHW is contiguous, so (N, C, H*W) is a free reshape.  Per grid step the
    # DMA is either one contiguous (C, HW) per-batch slab (small-HW path) or,
    # when HW > tm, a strided copy of C runs of tm*4 bytes with stride HW*4;
    # tm >= 512 keeps each run >= 2 KiB so the DMA engine stays near peak.
    x3 = x_nchw.reshape(N, C, HW)
    w = weight.reshape(1, C).astype(jnp.float32)
    b = bias.reshape(1).astype(jnp.float32)

    assert tm % 128 == 0 and tm >= 512, "tm must be a multiple of 128 and >= 512"

    use_pixel_tiling = (HW > tm) or (N == 1 and HW >= 1024)

    if use_pixel_tiling:
        if HW > tm:
            tm_eff = tm
        else:
            # N == 1 with a large spatial extent: split the pixels so both
            # TensorCores on v7x get a balanced step (no-op on v5e/v6e).
            tm_eff = max(512, 128 * ((HW // 2) // 128))
        n_tiles = pl.cdiv(HW, tm_eff)   # partial last tile -> masked boundary writes
        grid = (N, n_tiles)
        kernel = _conv1x1_pixel_kernel
        in_specs = [
            pl.BlockSpec((1, C), lambda n, i: (0, 0)),                 # resident weight
            pl.BlockSpec((None, C, tm_eff), lambda n, i: (n, 0, i)),   # pixel tile
            pl.BlockSpec(memory_space=pltpu.MemorySpace.SMEM),         # bias scalar
        ]
        out_specs = pl.BlockSpec((None, 1, tm_eff), lambda n, i: (n, 0, i))
        dims = ("parallel", "parallel")
    else:
        # Small-HW path: block several whole batches per grid step to amortize
        # the fixed per-step grid overhead (biggest lever for 7x7..32x32 maps).
        target_bytes = 4 * 1024 * 1024
        nb = max(1, target_bytes // (C * HW * 4))
        nb = min(nb, 8)                       # keep the unrolled matvec loop short
        if N >= 2:
            nb = min(nb, (N + 1) // 2)        # >= 2 parallel steps for v7x's 2 TCs
        nb = min(nb, N)
        n_steps = pl.cdiv(N, nb)              # partial last batch block is masked on store
        grid = (n_steps,)
        kernel = _make_batched_kernel(nb)
        in_specs = [
            pl.BlockSpec((1, C), lambda s: (0, 0)),                    # resident weight
            pl.BlockSpec((nb, C, HW), lambda s: (s, 0, 0)),            # NB whole batches
            pl.BlockSpec(memory_space=pltpu.MemorySpace.SMEM),         # bias scalar
        ]
        out_specs = pl.BlockSpec((nb, 1, HW), lambda s: (s, 0, 0))
        dims = ("parallel",)

    out = pl.pallas_call(
        kernel,
        out_shape=jax.ShapeDtypeStruct((N, 1, HW), jnp.float32),
        grid_spec=pltpu.PrefetchScalarGridSpec(
            num_scalar_prefetch=0,
            grid=grid,
            in_specs=in_specs,
            out_specs=out_specs,
        ),
        compiler_params=pltpu.CompilerParams(
            dimension_semantics=dims,
            # Explicit 32 MiB: v5e's scoped default is only 16 MiB, and v7x has
            # only 64 MiB physical VMEM per TC, so this is the safe budget for
            # the double-buffered x tile (<= 16 MiB at tm=1024) on all gens.
            vmem_limit_bytes=vmem_limit_bytes,
        ),
    )(w, x3, b)

    # (N, 1, H*W) -> (N, 1, H, W)  (free reshape)
    return out.reshape(N, 1, H, W)


if __name__ == "__main__":
    key = jax.random.PRNGKey(0)
    kx, kw, kb = jax.random.split(key, 3)

    # Module-consistent shapes: C must be 2048 (nn.Conv2d(2048, 1, 1)).
    N, C, H, W = 2, 2048, 16, 16
    x = jax.random.normal(kx, (N, C, H, W), dtype=jnp.float32)

    # Deterministic synthetic parameters (shapes from nn.Conv2d(2048, 1, 1)).
    weight = jax.random.normal(kw, (1, C, 1, 1), dtype=jnp.float32) * 0.02
    bias = jax.random.normal(kb, (1,), dtype=jnp.float32)

    out = conv1x1_nchw(x, weight, bias)
    out = jax.block_until_ready(out)

    # Reference check (plain JAX, highest precision): per-pixel dot over
    # channels + bias.
    ref = jnp.einsum("nchw,c->nhw", x, weight.reshape(C),
                     precision=jax.lax.Precision.HIGHEST) + bias[0]
    ref = ref[:, None, :, :]
    assert out.shape == (N, 1, H, W), out.shape
    max_err = float(jnp.max(jnp.abs(out - ref)))
    assert max_err < 2e-3, max_err

    print("KERNEL_OK")
</pallas_src>

<mosaic_0001>
module attributes {stable_mosaic.version = 11 : i64} {
  func.func @kernel(%arg0: i32, %arg1: memref<1x2048xf32, #tpu.memory_space<vmem>>, %arg2: memref<1x2048x256xf32, #tpu.memory_space<vmem>>, %arg3: memref<1xf32, #tpu.memory_space<smem>>, %arg4: memref<1x1x256xf32, #tpu.memory_space<vmem>>) attributes {dimension_semantics = [#tpu.dimension_semantics<parallel>], iteration_bounds = array<i64: 2>, scalar_prefetch = 0 : i64, scratch_operands = 0 : i64, tpu.core_type = #tpu.core_type<tc>, window_params = [{pipeline_mode = #tpu.pipeline_mode<synchronous>, transform_indices = @transform_0, window_bounds = array<i64: 1, 2048>}, {transform_indices = @transform_1, window_bounds = array<i64: 1, 2048, 256>}, {transform_indices = @transform_2, window_bounds = array<i64: 1>}, {transform_indices = @transform_3, window_bounds = array<i64: 1, 1, 256>}]} {
    %c0 = arith.constant 0 : index
    %c0_0 = arith.constant 0 : index
    %0 = vector.load %arg1[%c0, %c0_0] : memref<1x2048xf32, #tpu.memory_space<vmem>>, vector<1x2048xf32>
    %c0_1 = arith.constant 0 : index
    %1 = memref.load %arg3[%c0_1] : memref<1xf32, #tpu.memory_space<smem>>
    %c0_2 = arith.constant 0 : index
    %c0_3 = arith.constant 0 : index
    %c0_4 = arith.constant 0 : index
    %2 = vector.load %arg2[%c0_2, %c0_3, %c0_4] : memref<1x2048x256xf32, #tpu.memory_space<vmem>>, vector<1x2048x256xf32>
    %3 = vector.shape_cast %2 : vector<1x2048x256xf32> to vector<2048x256xf32>
    %cst = arith.constant dense<0.000000e+00> : vector<1x256xf32>
    %4 = tpu.matmul %0, %3, %cst {dimension_numbers = #tpu.dot_dimension_numbers<[1], [0], [0], [1], [0, 0, 1, 1], [], []>} : vector<1x2048xf32>, vector<2048x256xf32>, vector<1x256xf32> -> vector<1x256xf32>
    %5 = vector.broadcast %1 : f32 to vector<1x256xf32>
    %6 = arith.addf %4, %5 : vector<1x256xf32>
    %c0_5 = arith.constant 0 : index
    %c0_6 = arith.constant 0 : index
    %c0_7 = arith.constant 0 : index
    %7 = vector.load %arg4[%c0_5, %c0_6, %c0_7] : memref<1x1x256xf32, #tpu.memory_space<vmem>>, vector<1x1x256xf32>
    %8 = vector.shape_cast %7 : vector<1x1x256xf32> to vector<1x256xf32>
    %9 = vector.shape_cast %6 : vector<1x256xf32> to vector<1x1x256xf32>
    tpu.vector_store %arg4[%c0_5, %c0_6, %c0_7], %9 {strides = array<i32>} : memref<1x1x256xf32, #tpu.memory_space<vmem>>, vector<1x1x256xf32>,
    return
  }
  func.func @transform_0(%arg0: i32) -> (i32, i32) {
    %c0_i32 = arith.constant 0 : i32
    %c0_i32_0 = arith.constant 0 : i32
    %c0_i32_1 = arith.constant 0 : i32
    return %c0_i32, %c0_i32_0 : i32, i32
  }
  func.func @transform_1(%arg0: i32) -> (i32, i32, i32) {
    %c0_i32 = arith.constant 0 : i32
    %c0_i32_0 = arith.constant 0 : i32
    %c0_i32_1 = arith.constant 0 : i32
    return %arg0, %c0_i32, %c0_i32_0 : i32, i32, i32
  }
  func.func @transform_2(%arg0: i32) -> i32 {
    %c0_i32 = arith.constant 0 : i32
    %c0_i32_0 = arith.constant 0 : i32
    return %c0_i32 : i32
  }
  func.func @transform_3(%arg0: i32) -> (i32, i32, i32) {
    %c0_i32 = arith.constant 0 : i32
    %c0_i32_0 = arith.constant 0 : i32
    %c0_i32_1 = arith.constant 0 : i32
    return %arg0, %c0_i32, %c0_i32_0 : i32, i32, i32
  }
}

</mosaic_0001>

<llo_original>
// kernel: tpu_custom_call.1
$region0: #{tpu_custom_call.1}
  #allocation0 [shape = 'u32[]', space=smem, size = 0x4, offset = 0x4, fixed_abs, tag = 'smem constant byte address 0x4 - core index']
  #allocation1 [shape = 'u32[144,128]{1,0:T(1,128)}', space=vmem, size = 0x12000, scoped, tag = 'internal scratch']
  #allocation2 [shape = 'f32[1]{0:T(128)S(6)}', space=smem, size = 0x200, scoped, tag = 'scoped memory for tpu_custom_call.1']
  %s0 = inlined_call_operand.hbm [shape: f32[1,2048], index: 0, kind: input, shape index: {}]
  %s1 = inlined_call_operand.hbm [shape: f32[2,2048,256], index: 1, kind: input, shape index: {}]
  %s2 = inlined_call_operand.<no memory space> [shape: f32[1], index: 2, kind: input, shape index: {}]
  %s3 = inlined_call_operand.hbm [shape: f32[2,1,256], index: 3, kind: output, shape index: {}]
  %s4 = sld [smem:[#allocation0]]
  $region53: #{tpu_custom_call.1} parent=0
    _
  %s6 = ssub.s32 1, %s4
  %s7 = scalar_select 0, %s6, %s4
  %8 = sst [smem:[#allocation2]] %s2
  $region1: #{tpu_custom_call.1} parent=0
    #allocation3 [shape = 'u8[8192]{0}', space=vmem, size = 0x2000, scoped, tag = 'input window, operand 0, single buffered']
    #allocation4 [shape = 's32[2]{0}', space=sflag, size = 0x8, scoped, tag = 'scoped memory for tpu_custom_call.1']
    #allocation5 [shape = 's32[2]{0}', space=sflag, size = 0x8, scoped, tag = 'scoped memory for tpu_custom_call.1']
    #allocation6 [shape = 'u8[4194304]{0}', space=vmem, size = 0x400000, scoped, tag = 'input window, operand 1']
    #allocation7 [shape = 's32[2]{0}', space=sflag, size = 0x8, scoped, tag = 'scoped memory for tpu_custom_call.1']
    #allocation8 [shape = 'u8[2048]{0}', space=vmem, size = 0x800, scoped, tag = 'output window, operand 0']
    %9 = vsyncpa [#allocation4], 0
    %10 = vsyncpa [#allocation7], 0
    %s11 = scalar_lea.sflag [#allocation7], 1
    %12 = vsyncpa %s11, 0
    %13 = vsyncpa [#allocation5], 0
    %s14 = scalar_lea.sflag [#allocation5], 1
    %15 = vsyncpa %s14, 0
    loop: start=0, step=1, limit=4
    $region2: #{tpu_custom_call.1} parent=1 // loop_pre_header
      _
    $region3: #{tpu_custom_call.1} parent=1 // loop_header
      %s17 = sphi 0, %s21
      %p18 = scmp.ge.s32.totalorder %s17, 4
      %s25 = sphi 0, %s25
      %s27 = sphi 0, %s25
      %s28 = sphi 0, %s27
      %s42 = sphi 0, %s28
      %s48 = sphi 0, %s50
      %s51 = sphi 0, %s48
      %s52 = sphi 0, %s51
      %s68 = sphi 0, %s52
      %s72 = sphi 0, %s72
      %s74 = sphi 0, %s72
      %s75 = sphi 0, %s74
      %s89 = sphi 0, %s75
      %s95 = sphi 0, %s97
      %s98 = sphi 0, %s95
      %s99 = sphi 0, %s98
      %s115 = sphi 0, %s99
    $region4: #{tpu_custom_call.1} parent=1 // loop_header_branch
      %20 = sbr.rel (%p18) target = $region8
    $region5: #{tpu_custom_call.1} parent=1 // loop_body
      %s22 = ssub.s32 %s17, 1
      %s23 = ssub.s32 %s17, 2
      %s24 = sadd.s32 %s17, 1
      %s26 = sadd.s32 %s25, 1
      %p29 = scmp.eq.s32.totalorder %s17, 1
      %p30 = scmp.ne.s32.totalorder %s25, %s27
      %p31 = scmp.eq.s32.totalorder %s17, 0
      %p32 = por %p30, %p31
      %p33 = scmp.ne.s32.totalorder %s25, %s27
      %p34 = scmp.eq.s32.totalorder %s22, 1
      %p35 = por %p33, %p34
      %p36 = scmp.ne.s32.totalorder %s27, %s28
      %p37 = scmp.eq.s32.totalorder %s22, 0
      %p38 = por %p36, %p37
      %p39 = scmp.ne.s32.totalorder %s27, %s28
      %p40 = scmp.eq.s32.totalorder %s23, 1
      %p41 = por %p39, %p40
      %p43 = scmp.ne.s32.totalorder %s28, %s42
      %p44 = scmp.eq.s32.totalorder %s23, 0
      %p45 = por %p43, %p44
      %s46 = ssub.s32 %s17, %s24
      %p47 = scmp.eq.s32.totalorder %s46, 0
      %s49 = sadd.s32 %s48, 1
      %s50 = scalar_select %p47, %s48, %s49
      %p53 = pneg %p47
      %p54 = scmp.eq.s32.totalorder %s17, 1
      %p55 = por %p53, %p54
      %p56 = scmp.ne.s32.totalorder %s48, %s51
      %p57 = scmp.eq.s32.totalorder %s17, 0
      %p58 = por %p56, %p57
      %p59 = scmp.ne.s32.totalorder %s48, %s51
      %p60 = scmp.eq.s32.totalorder %s22, 1
      %p61 = por %p59, %p60
      %p62 = scmp.ne.s32.totalorder %s51, %s52
      %p63 = scmp.eq.s32.totalorder %s22, 0
      %p64 = por %p62, %p63
      %p65 = scmp.ne.s32.totalorder %s51, %s52
      %p66 = scmp.eq.s32.totalorder %s23, 1
      %p67 = por %p65, %p66
      %p69 = scmp.ne.s32.totalorder %s52, %s68
      %p70 = scmp.eq.s32.totalorder %s23, 0
      %p71 = por %p69, %p70
      %s73 = sadd.s32 %s72, 1
      %p76 = scmp.eq.s32.totalorder %s17, 1
      %p77 = scmp.ne.s32.totalorder %s72, %s74
      %p78 = scmp.eq.s32.totalorder %s17, 0
      %p79 = por %p77, %p78
      %p80 = scmp.ne.s32.totalorder %s72, %s74
      %p81 = scmp.eq.s32.totalorder %s22, 1
      %p82 = por %p80, %p81
      %p83 = scmp.ne.s32.totalorder %s74, %s75
      %p84 = scmp.eq.s32.totalorder %s22, 0
      %p85 = por %p83, %p84
      %p86 = scmp.ne.s32.totalorder %s74, %s75
      %p87 = scmp.eq.s32.totalorder %s23, 1
      %p88 = por %p86, %p87
      %p90 = scmp.ne.s32.totalorder %s75, %s89
      %p91 = scmp.eq.s32.totalorder %s23, 0
      %p92 = por %p90, %p91
      %s93 = ssub.s32 %s17, %s24
      %p94 = scmp.eq.s32.totalorder %s93, 0
      %s96 = sadd.s32 %s95, 1
      %s97 = scalar_select %p94, %s95, %s96
      %p100 = pneg %p94
      %p101 = scmp.eq.s32.totalorder %s17, 1
      %p102 = por %p100, %p101
      %p103 = scmp.ne.s32.totalorder %s95, %s98
      %p104 = scmp.eq.s32.totalorder %s17, 0
      %p105 = por %p103, %p104
      %p106 = scmp.ne.s32.totalorder %s95, %s98
      %p107 = scmp.eq.s32.totalorder %s22, 1
      %p108 = por %p106, %p107
      %p109 = scmp.ne.s32.totalorder %s98, %s99
      %p110 = scmp.eq.s32.totalorder %s22, 0
      %p111 = por %p109, %p110
      %p112 = scmp.ne.s32.totalorder %s98, %s99
      %p113 = scmp.eq.s32.totalorder %s23, 1
      %p114 = por %p112, %p113
      %p116 = scmp.ne.s32.totalorder %s99, %s115
      %p117 = scmp.eq.s32.totalorder %s23, 0
      %p118 = por %p116, %p117
      %p119 = scmp.le.s32.totalorder 1, %s17
      %p120 = scmp.lt.s32.totalorder %s17, 3
      %p121 = pnand %p119, %p120
      %p122 = pneg %p121
      // Predicated region
      $region9: #{tpu_custom_call.1} parent=5 // pred_check
        _
      $region10: #{tpu_custom_call.1} parent=5 // pred_check_branch
        %124 = sbr.rel (%p121) target = $region12
      $region11: #{tpu_custom_call.1} parent=5 // pred_region
        %s125 = ssub.s32 %s17, 1
        // Predicated region
        $region13: #{tpu_custom_call.1} parent=11 // pred_check
          %p126 = pneg %p38
        $region14: #{tpu_custom_call.1} parent=11 // pred_check_branch
          %128 = sbr.rel (%p126) target = $region16
        $region15: #{tpu_custom_call.1} parent=11 // pred_region
          %s130 = ssub.s32 256, 256
          %131 = vsyncadd [#allocation4], %s130
          %s133 = sshll.u32 [#allocation3], 4
          %s134 = int_to_ptr.vmem [resolvable:$true] %s133
          %136 = dma.hbm_to_vmem [thread:$0]  %s0, 256, %s134, [#allocation4]
        $region16: #{tpu_custom_call.1} parent=11 // pred_fallthru
          _
        // Predicated region
        $region17: #{tpu_custom_call.1} parent=11 // pred_check
          %p137 = pneg %p85
        $region18: #{tpu_custom_call.1} parent=11 // pred_check_branch
          %139 = sbr.rel (%p137) target = $region20
        $region19: #{tpu_custom_call.1} parent=11 // pred_region
          _
        $region20: #{tpu_custom_call.1} parent=11 // pred_fallthru
          _
      $region12: #{tpu_custom_call.1} parent=5 // pred_fallthru
        _
      %p140 = scmp.lt.s32.totalorder %s17, 2
      // Predicated region
      $region21: #{tpu_custom_call.1} parent=5 // pred_check
        %p141 = pneg %p140
      $region22: #{tpu_custom_call.1} parent=5 // pred_check_branch
        %143 = sbr.rel (%p141) target = $region24
      $region23: #{tpu_custom_call.1} parent=5 // pred_region
        // Predicated region
        $region25: #{tpu_custom_call.1} parent=23 // pred_check
          %p144 = pneg %p58
        $region26: #{tpu_custom_call.1} parent=23 // pred_check_branch
          %146 = sbr.rel (%p144) target = $region28
        $region27: #{tpu_custom_call.1} parent=23 // pred_region
          %s147 = sand.u32 %s48, 1
          %s148 = scalar_lea.sflag [#allocation7], %s147
          %s149 = sand.u32 %s48, 1
          %s150 = smul.addr %s149, 4096
          %s151 = scalar_lea.vmem [#allocation6], %s150
          %s153 = ssub.s32 65536, 65536
          %154 = vsyncadd %s148, %s153
          %s155 = smul.addr %s17, 512
          %s156 = smul.addr %s155, 128
          %s157 = scalar_lea.hbm %s1, %s156
          %s158 = sshll.u32 %s151, 4
          %s159 = int_to_ptr.vmem [resolvable:$true] %s158
          %164 = dma.hbm_to_vmem [thread:$0]  %s157, 65536, %s159, %s148, 256, 256, 16
        $region28: #{tpu_custom_call.1} parent=23 // pred_fallthru
          _
      $region24: #{tpu_custom_call.1} parent=5 // pred_fallthru
        _
      %p165 = scmp.le.s32.totalorder 1, %s17
      %p166 = scmp.lt.s32.totalorder %s17, 3
      %p167 = pnand %p165, %p166
      %p168 = pneg %p167
      // Predicated region
      $region29: #{tpu_custom_call.1} parent=5 // pred_check
        _
      $region30: #{tpu_custom_call.1} parent=5 // pred_check_branch
        %170 = sbr.rel (%p167) target = $region32
      $region31: #{tpu_custom_call.1} parent=5 // pred_region
        %s171 = ssub.s32 %s17, 1
        // Predicated region
        $region33: #{tpu_custom_call.1} parent=31 // pred_check
          %p172 = pneg %p38
        $region34: #{tpu_custom_call.1} parent=31 // pred_check_branch
          %174 = sbr.rel (%p172) target = $region36
        $region35: #{tpu_custom_call.1} parent=31 // pred_region
          %175 = dma.done [#allocation4], 256
        $region36: #{tpu_custom_call.1} parent=31 // pred_fallthru
          _
        %s176 = sand.u32 %s51, 1
        %s177 = scalar_lea.sflag [#allocation7], %s176
        %s178 = sand.u32 %s51, 1
        %s179 = smul.addr %s178, 4096
        %s180 = scalar_lea.vmem [#allocation6], %s179
        // Predicated region
        $region37: #{tpu_custom_call.1} parent=31 // pred_check
          %p181 = pneg %p64
        $region38: #{tpu_custom_call.1} parent=31 // pred_check_branch
          %183 = sbr.rel (%p181) target = $region40
        $region39: #{tpu_custom_call.1} parent=31 // pred_region
          %184 = dma.done %s177, 65536
        $region40: #{tpu_custom_call.1} parent=31 // pred_fallthru
          _
        %p185 = pneg %p38
        %p186 = pneg %p35
        %s187 = sand.u32 %s51, 1
        %s188 = scalar_lea.sflag [#allocation7], %s187
        %s189 = sand.u32 %s51, 1
        %s190 = smul.addr %s189, 4096
        %s191 = scalar_lea.vmem [#allocation6], %s190
        %p192 = pneg %p64
        %p193 = pneg %p61
        %p194 = pneg %p85
        %p195 = pneg %p82
        %p196 = pneg %p111
        %p197 = pneg %p108
        %s198 = sand.u32 %s98, 1
        %s199 = scalar_lea.sflag [#allocation5], %s198
        %s200 = sand.u32 %s98, 1
        %s201 = smul.addr %s200, 2
        %s202 = scalar_lea.vmem [#allocation8], %s201
        %v203 = vld [vmem:[#allocation3] sm:$0xff]
        %v204 = vld [vmem:[#allocation3 + $0x8] sm:$0xff]
        %s205 = sld [smem:[#allocation2]]
        %v206 = vld [vmem:[%s180] sm:$0xff]
        %v207 = vld [vmem:[%s180 + $0x8] sm:$0xff]
        %v208 = vld [vmem:[%s180 + $0x10] sm:$0xff]
        %v209 = vld [vmem:[%s180 + $0x18] sm:$0xff]
        %v210 = vld [vmem:[%s180 + $0x20] sm:$0xff]
        %v211 = vld [vmem:[%s180 + $0x28] sm:$0xff]
        %v212 = vld [vmem:[%s180 + $0x30] sm:$0xff]
        %v213 = vld [vmem:[%s180 + $0x38] sm:$0xff]
        %v214 = vld [vmem:[%s180 + $0x40] sm:$0xff]
        %v215 = vld [vmem:[%s180 + $0x48] sm:$0xff]
        %v216 = vld [vmem:[%s180 + $0x50] sm:$0xff]
        %v217 = vld [vmem:[%s180 + $0x58] sm:$0xff]
        %v218 = vld [vmem:[%s180 + $0x60] sm:$0xff]
        %v219 = vld [vmem:[%s180 + $0x68] sm:$0xff]
        %v220 = vld [vmem:[%s180 + $0x70] sm:$0xff]
        %v221 = vld [vmem:[%s180 + $0x78] sm:$0xff]
        %v222 = vld [vmem:[%s180 + $0x80] sm:$0xff]
        %v223 = vld [vmem:[%s180 + $0x88] sm:$0xff]
        %v224 = vld [vmem:[%s180 + $0x90] sm:$0xff]
        %v225 = vld [vmem:[%s180 + $0x98] sm:$0xff]
        %v226 = vld [vmem:[%s180 + $0xa0] sm:$0xff]
        %v227 = vld [vmem:[%s180 + $0xa8] sm:$0xff]
        %v228 = vld [vmem:[%s180 + $0xb0] sm:$0xff]
        %v229 = vld [vmem:[%s180 + $0xb8] sm:$0xff]
        %v230 = vld [vmem:[%s180 + $0xc0] sm:$0xff]
        %v231 = vld [vmem:[%s180 + $0xc8] sm:$0xff]
        %v232 = vld [vmem:[%s180 + $0xd0] sm:$0xff]
        %v233 = vld [vmem:[%s180 + $0xd8] sm:$0xff]
        %v234 = vld [vmem:[%s180 + $0xe0] sm:$0xff]
        %v235 = vld [vmem:[%s180 + $0xe8] sm:$0xff]
        %v236 = vld [vmem:[%s180 + $0xf0] sm:$0xff]
        %v237 = vld [vmem:[%s180 + $0xf8] sm:$0xff]
        %v238 = vld [vmem:[%s180 + $0x100] sm:$0xff]
        %v239 = vld [vmem:[%s180 + $0x108] sm:$0xff]
        %v240 = vld [vmem:[%s180 + $0x110] sm:$0xff]
        %v241 = vld [vmem:[%s180 + $0x118] sm:$0xff]
        %v242 = vld [vmem:[%s180 + $0x120] sm:$0xff]
        %v243 = vld [vmem:[%s180 + $0x128] sm:$0xff]
        %v244 = vld [vmem:[%s180 + $0x130] sm:$0xff]
        %v245 = vld [vmem:[%s180 + $0x138] sm:$0xff]
        %v246 = vld [vmem:[%s180 + $0x140] sm:$0xff]
        %v247 = vld [vmem:[%s180 + $0x148] sm:$0xff]
        %v248 = vld [vmem:[%s180 + $0x150] sm:$0xff]
        %v249 = vld [vmem:[%s180 + $0x158] sm:$0xff]
        %v250 = vld [vmem:[%s180 + $0x160] sm:$0xff]
        %v251 = vld [vmem:[%s180 + $0x168] sm:$0xff]
        %v252 = vld [vmem:[%s180 + $0x170] sm:$0xff]
        %v253 = vld [vmem:[%s180 + $0x178] sm:$0xff]
        %v254 = vld [vmem:[%s180 + $0x180] sm:$0xff]
        %v255 = vld [vmem:[%s180 + $0x188] sm:$0xff]
        %v256 = vld [vmem:[%s180 + $0x190] sm:$0xff]
        %v257 = vld [vmem:[%s180 + $0x198] sm:$0xff]
        %v258 = vld [vmem:[%s180 + $0x1a0] sm:$0xff]
        %v259 = vld [vmem:[%s180 + $0x1a8] sm:$0xff]
        %v260 = vld [vmem:[%s180 + $0x1b0] sm:$0xff]
        %v261 = vld [vmem:[%s180 + $0x1b8] sm:$0xff]
        %v262 = vld [vmem:[%s180 + $0x1c0] sm:$0xff]
        %v263 = vld [vmem:[%s180 + $0x1c8] sm:$0xff]
        %v264 = vld [vmem:[%s180 + $0x1d0] sm:$0xff]
        %v265 = vld [vmem:[%s180 + $0x1d8] sm:$0xff]
        %v266 = vld [vmem:[%s180 + $0x1e0] sm:$0xff]
        %v267 = vld [vmem:[%s180 + $0x1e8] sm:$0xff]
        %v268 = vld [vmem:[%s180 + $0x1f0] sm:$0xff]
        %v269 = vld [vmem:[%s180 + $0x1f8] sm:$0xff]
        %v270 = vld [vmem:[%s180 + $0x200] sm:$0xff]
        %v271 = vld [vmem:[%s180 + $0x208] sm:$0xff]
        %v272 = vld [vmem:[%s180 + $0x210] sm:$0xff]
        %v273 = vld [vmem:[%s180 + $0x218] sm:$0xff]
        %v274 = vld [vmem:[%s180 + $0x220] sm:$0xff]
        %v275 = vld [vmem:[%s180 + $0x228] sm:$0xff]
        %v276 = vld [vmem:[%s180 + $0x230] sm:$0xff]
        %v277 = vld [vmem:[%s180 + $0x238] sm:$0xff]
        %v278 = vld [vmem:[%s180 + $0x240] sm:$0xff]
        %v279 = vld [vmem:[%s180 + $0x248] sm:$0xff]
        %v280 = vld [vmem:[%s180 + $0x250] sm:$0xff]
        %v281 = vld [vmem:[%s180 + $0x258] sm:$0xff]
        %v282 = vld [vmem:[%s180 + $0x260] sm:$0xff]
        %v283 = vld [vmem:[%s180 + $0x268] sm:$0xff]
        %v284 = vld [vmem:[%s180 + $0x270] sm:$0xff]
        %v285 = vld [vmem:[%s180 + $0x278] sm:$0xff]
        %v286 = vld [vmem:[%s180 + $0x280] sm:$0xff]
        %v287 = vld [vmem:[%s180 + $0x288] sm:$0xff]
        %v288 = vld [vmem:[%s180 + $0x290] sm:$0xff]
        %v289 = vld [vmem:[%s180 + $0x298] sm:$0xff]
        %v290 = vld [vmem:[%s180 + $0x2a0] sm:$0xff]
        %v291 = vld [vmem:[%s180 + $0x2a8] sm:$0xff]
        %v292 = vld [vmem:[%s180 + $0x2b0] sm:$0xff]
        %v293 = vld [vmem:[%s180 + $0x2b8] sm:$0xff]
        %v294 = vld [vmem:[%s180 + $0x2c0] sm:$0xff]
        %v295 = vld [vmem:[%s180 + $0x2c8] sm:$0xff]
        %v296 = vld [vmem:[%s180 + $0x2d0] sm:$0xff]
        %v297 = vld [vmem:[%s180 + $0x2d8] sm:$0xff]
        %v298 = vld [vmem:[%s180 + $0x2e0] sm:$0xff]
        %v299 = vld [vmem:[%s180 + $0x2e8] sm:$0xff]
        %v300 = vld [vmem:[%s180 + $0x2f0] sm:$0xff]
        %v301 = vld [vmem:[%s180 + $0x2f8] sm:$0xff]
        %v302 = vld [vmem:[%s180 + $0x300] sm:$0xff]
        %v303 = vld [vmem:[%s180 + $0x308] sm:$0xff]
        %v304 = vld [vmem:[%s180 + $0x310] sm:$0xff]
        %v305 = vld [vmem:[%s180 + $0x318] sm:$0xff]
        %v306 = vld [vmem:[%s180 + $0x320] sm:$0xff]
        %v307 = vld [vmem:[%s180 + $0x328] sm:$0xff]
        %v308 = vld [vmem:[%s180 + $0x330] sm:$0xff]
        %v309 = vld [vmem:[%s180 + $0x338] sm:$0xff]
        %v310 = vld [vmem:[%s180 + $0x340] sm:$0xff]
        %v311 = vld [vmem:[%s180 + $0x348] sm:$0xff]
        %v312 = vld [vmem:[%s180 + $0x350] sm:$0xff]
        %v313 = vld [vmem:[%s180 + $0x358] sm:$0xff]
        %v314 = vld [vmem:[%s180 + $0x360] sm:$0xff]
        %v315 = vld [vmem:[%s180 + $0x368] sm:$0xff]
        %v316 = vld [vmem:[%s180 + $0x370] sm:$0xff]
        %v317 = vld [vmem:[%s180 + $0x378] sm:$0xff]
        %v318 = vld [vmem:[%s180 + $0x380] sm:$0xff]
        %v319 = vld [vmem:[%s180 + $0x388] sm:$0xff]
        %v320 = vld [vmem:[%s180 + $0x390] sm:$0xff]
        %v321 = vld [vmem:[%s180 + $0x398] sm:$0xff]
        %v322 = vld [vmem:[%s180 + $0x3a0] sm:$0xff]
        %v323 = vld [vmem:[%s180 + $0x3a8] sm:$0xff]
        %v324 = vld [vmem:[%s180 + $0x3b0] sm:$0xff]
        %v325 = vld [vmem:[%s180 + $0x3b8] sm:$0xff]
        %v326 = vld [vmem:[%s180 + $0x3c0] sm:$0xff]
        %v327 = vld [vmem:[%s180 + $0x3c8] sm:$0xff]
        %v328 = vld [vmem:[%s180 + $0x3d0] sm:$0xff]
        %v329 = vld [vmem:[%s180 + $0x3d8] sm:$0xff]
        %v330 = vld [vmem:[%s180 + $0x3e0] sm:$0xff]
        %v331 = vld [vmem:[%s180 + $0x3e8] sm:$0xff]
        %v332 = vld [vmem:[%s180 + $0x3f0] sm:$0xff]
        %v333 = vld [vmem:[%s180 + $0x3f8] sm:$0xff]
        %v334 = vld [vmem:[%s180 + $0x400] sm:$0xff]
        %v335 = vld [vmem:[%s180 + $0x408] sm:$0xff]
        %v336 = vld [vmem:[%s180 + $0x410] sm:$0xff]
        %v337 = vld [vmem:[%s180 + $0x418] sm:$0xff]
        %v338 = vld [vmem:[%s180 + $0x420] sm:$0xff]
        %v339 = vld [vmem:[%s180 + $0x428] sm:$0xff]
        %v340 = vld [vmem:[%s180 + $0x430] sm:$0xff]
        %v341 = vld [vmem:[%s180 + $0x438] sm:$0xff]
        %v342 = vld [vmem:[%s180 + $0x440] sm:$0xff]
        %v343 = vld [vmem:[%s180 + $0x448] sm:$0xff]
        %v344 = vld [vmem:[%s180 + $0x450] sm:$0xff]
        %v345 = vld [vmem:[%s180 + $0x458] sm:$0xff]
        %v346 = vld [vmem:[%s180 + $0x460] sm:$0xff]
        %v347 = vld [vmem:[%s180 + $0x468] sm:$0xff]
        %v348 = vld [vmem:[%s180 + $0x470] sm:$0xff]
        %v349 = vld [vmem:[%s180 + $0x478] sm:$0xff]
        %v350 = vld [vmem:[%s180 + $0x480] sm:$0xff]
        %v351 = vld [vmem:[%s180 + $0x488] sm:$0xff]
        %v352 = vld [vmem:[%s180 + $0x490] sm:$0xff]
        %v353 = vld [vmem:[%s180 + $0x498] sm:$0xff]
        %v354 = vld [vmem:[%s180 + $0x4a0] sm:$0xff]
        %v355 = vld [vmem:[%s180 + $0x4a8] sm:$0xff]
        %v356 = vld [vmem:[%s180 + $0x4b0] sm:$0xff]
        %v357 = vld [vmem:[%s180 + $0x4b8] sm:$0xff]
        %v358 = vld [vmem:[%s180 + $0x4c0] sm:$0xff]
        %v359 = vld [vmem:[%s180 + $0x4c8] sm:$0xff]
        %v360 = vld [vmem:[%s180 + $0x4d0] sm:$0xff]
        %v361 = vld [vmem:[%s180 + $0x4d8] sm:$0xff]
        %v362 = vld [vmem:[%s180 + $0x4e0] sm:$0xff]
        %v363 = vld [vmem:[%s180 + $0x4e8] sm:$0xff]
        %v364 = vld [vmem:[%s180 + $0x4f0] sm:$0xff]
        %v365 = vld [vmem:[%s180 + $0x4f8] sm:$0xff]
        %v366 = vld [vmem:[%s180 + $0x500] sm:$0xff]
        %v367 = vld [vmem:[%s180 + $0x508] sm:$0xff]
        %v368 = vld [vmem:[%s180 + $0x510] sm:$0xff]
        %v369 = vld [vmem:[%s180 + $0x518] sm:$0xff]
        %v370 = vld [vmem:[%s180 + $0x520] sm:$0xff]
        %v371 = vld [vmem:[%s180 + $0x528] sm:$0xff]
        %v372 = vld [vmem:[%s180 + $0x530] sm:$0xff]
        %v373 = vld [vmem:[%s180 + $0x538] sm:$0xff]
        %v374 = vld [vmem:[%s180 + $0x540] sm:$0xff]
        %v375 = vld [vmem:[%s180 + $0x548] sm:$0xff]
        %v376 = vld [vmem:[%s180 + $0x550] sm:$0xff]
        %v377 = vld [vmem:[%s180 + $0x558] sm:$0xff]
        %v378 = vld [vmem:[%s180 + $0x560] sm:$0xff]
        %v379 = vld [vmem:[%s180 + $0x568] sm:$0xff]
        %v380 = vld [vmem:[%s180 + $0x570] sm:$0xff]
        %v381 = vld [vmem:[%s180 + $0x578] sm:$0xff]
        %v382 = vld [vmem:[%s180 + $0x580] sm:$0xff]
        %v383 = vld [vmem:[%s180 + $0x588] sm:$0xff]
        %v384 = vld [vmem:[%s180 + $0x590] sm:$0xff]
        %v385 = vld [vmem:[%s180 + $0x598] sm:$0xff]
        %v386 = vld [vmem:[%s180 + $0x5a0] sm:$0xff]
        %v387 = vld [vmem:[%s180 + $0x5a8] sm:$0xff]
        %v388 = vld [vmem:[%s180 + $0x5b0] sm:$0xff]
        %v389 = vld [vmem:[%s180 + $0x5b8] sm:$0xff]
        %v390 = vld [vmem:[%s180 + $0x5c0] sm:$0xff]
        %v391 = vld [vmem:[%s180 + $0x5c8] sm:$0xff]
        %v392 = vld [vmem:[%s180 + $0x5d0] sm:$0xff]
        %v393 = vld [vmem:[%s180 + $0x5d8] sm:$0xff]
        %v394 = vld [vmem:[%s180 + $0x5e0] sm:$0xff]
        %v395 = vld [vmem:[%s180 + $0x5e8] sm:$0xff]
        %v396 = vld [vmem:[%s180 + $0x5f0] sm:$0xff]
        %v397 = vld [vmem:[%s180 + $0x5f8] sm:$0xff]
        %v398 = vld [vmem:[%s180 + $0x600] sm:$0xff]
        %v399 = vld [vmem:[%s180 + $0x608] sm:$0xff]
        %v400 = vld [vmem:[%s180 + $0x610] sm:$0xff]
        %v401 = vld [vmem:[%s180 + $0x618] sm:$0xff]
        %v402 = vld [vmem:[%s180 + $0x620] sm:$0xff]
        %v403 = vld [vmem:[%s180 + $0x628] sm:$0xff]
        %v404 = vld [vmem:[%s180 + $0x630] sm:$0xff]
        %v405 = vld [vmem:[%s180 + $0x638] sm:$0xff]
        %v406 = vld [vmem:[%s180 + $0x640] sm:$0xff]
        %v407 = vld [vmem:[%s180 + $0x648] sm:$0xff]
        %v408 = vld [vmem:[%s180 + $0x650] sm:$0xff]
        %v409 = vld [vmem:[%s180 + $0x658] sm:$0xff]
        %v410 = vld [vmem:[%s180 + $0x660] sm:$0xff]
        %v411 = vld [vmem:[%s180 + $0x668] sm:$0xff]
        %v412 = vld [vmem:[%s180 + $0x670] sm:$0xff]
        %v413 = vld [vmem:[%s180 + $0x678] sm:$0xff]
        %v414 = vld [vmem:[%s180 + $0x680] sm:$0xff]
        %v415 = vld [vmem:[%s180 + $0x688] sm:$0xff]
        %v416 = vld [vmem:[%s180 + $0x690] sm:$0xff]
        %v417 = vld [vmem:[%s180 + $0x698] sm:$0xff]
        %v418 = vld [vmem:[%s180 + $0x6a0] sm:$0xff]
        %v419 = vld [vmem:[%s180 + $0x6a8] sm:$0xff]
        %v420 = vld [vmem:[%s180 + $0x6b0] sm:$0xff]
        %v421 = vld [vmem:[%s180 + $0x6b8] sm:$0xff]
        %v422 = vld [vmem:[%s180 + $0x6c0] sm:$0xff]
        %v423 = vld [vmem:[%s180 + $0x6c8] sm:$0xff]
        %v424 = vld [vmem:[%s180 + $0x6d0] sm:$0xff]
        %v425 = vld [vmem:[%s180 + $0x6d8] sm:$0xff]
        %v426 = vld [vmem:[%s180 + $0x6e0] sm:$0xff]
        %v427 = vld [vmem:[%s180 + $0x6e8] sm:$0xff]
        %v428 = vld [vmem:[%s180 + $0x6f0] sm:$0xff]
        %v429 = vld [vmem:[%s180 + $0x6f8] sm:$0xff]
        %v430 = vld [vmem:[%s180 + $0x700] sm:$0xff]
        %v431 = vld [vmem:[%s180 + $0x708] sm:$0xff]
        %v432 = vld [vmem:[%s180 + $0x710] sm:$0xff]
        %v433 = vld [vmem:[%s180 + $0x718] sm:$0xff]
        %v434 = vld [vmem:[%s180 + $0x720] sm:$0xff]
        %v435 = vld [vmem:[%s180 + $0x728] sm:$0xff]
        %v436 = vld [vmem:[%s180 + $0x730] sm:$0xff]
        %v437 = vld [vmem:[%s180 + $0x738] sm:$0xff]
        %v438 = vld [vmem:[%s180 + $0x740] sm:$0xff]
        %v439 = vld [vmem:[%s180 + $0x748] sm:$0xff]
        %v440 = vld [vmem:[%s180 + $0x750] sm:$0xff]
        %v441 = vld [vmem:[%s180 + $0x758] sm:$0xff]
        %v442 = vld [vmem:[%s180 + $0x760] sm:$0xff]
        %v443 = vld [vmem:[%s180 + $0x768] sm:$0xff]
        %v444 = vld [vmem:[%s180 + $0x770] sm:$0xff]
        %v445 = vld [vmem:[%s180 + $0x778] sm:$0xff]
        %v446 = vld [vmem:[%s180 + $0x780] sm:$0xff]
        %v447 = vld [vmem:[%s180 + $0x788] sm:$0xff]
        %v448 = vld [vmem:[%s180 + $0x790] sm:$0xff]
        %v449 = vld [vmem:[%s180 + $0x798] sm:$0xff]
        %v450 = vld [vmem:[%s180 + $0x7a0] sm:$0xff]
        %v451 = vld [vmem:[%s180 + $0x7a8] sm:$0xff]
        %v452 = vld [vmem:[%s180 + $0x7b0] sm:$0xff]
        %v453 = vld [vmem:[%s180 + $0x7b8] sm:$0xff]
        %v454 = vld [vmem:[%s180 + $0x7c0] sm:$0xff]
        %v455 = vld [vmem:[%s180 + $0x7c8] sm:$0xff]
        %v456 = vld [vmem:[%s180 + $0x7d0] sm:$0xff]
        %v457 = vld [vmem:[%s180 + $0x7d8] sm:$0xff]
        %v458 = vld [vmem:[%s180 + $0x7e0] sm:$0xff]
        %v459 = vld [vmem:[%s180 + $0x7e8] sm:$0xff]
        %v460 = vld [vmem:[%s180 + $0x7f0] sm:$0xff]
        %v461 = vld [vmem:[%s180 + $0x7f8] sm:$0xff]
        %v462 = vld [vmem:[%s180 + $0x800] sm:$0xff]
        %v463 = vld [vmem:[%s180 + $0x808] sm:$0xff]
        %v464 = vld [vmem:[%s180 + $0x810] sm:$0xff]
        %v465 = vld [vmem:[%s180 + $0x818] sm:$0xff]
        %v466 = vld [vmem:[%s180 + $0x820] sm:$0xff]
        %v467 = vld [vmem:[%s180 + $0x828] sm:$0xff]
        %v468 = vld [vmem:[%s180 + $0x830] sm:$0xff]
        %v469 = vld [vmem:[%s180 + $0x838] sm:$0xff]
        %v470 = vld [vmem:[%s180 + $0x840] sm:$0xff]
        %v471 = vld [vmem:[%s180 + $0x848] sm:$0xff]
        %v472 = vld [vmem:[%s180 + $0x850] sm:$0xff]
        %v473 = vld [vmem:[%s180 + $0x858] sm:$0xff]
        %v474 = vld [vmem:[%s180 + $0x860] sm:$0xff]
        %v475 = vld [vmem:[%s180 + $0x868] sm:$0xff]
        %v476 = vld [vmem:[%s180 + $0x870] sm:$0xff]
        %v477 = vld [vmem:[%s180 + $0x878] sm:$0xff]
        %v478 = vld [vmem:[%s180 + $0x880] sm:$0xff]
        %v479 = vld [vmem:[%s180 + $0x888] sm:$0xff]
        %v480 = vld [vmem:[%s180 + $0x890] sm:$0xff]
        %v481 = vld [vmem:[%s180 + $0x898] sm:$0xff]
        %v482 = vld [vmem:[%s180 + $0x8a0] sm:$0xff]
        %v483 = vld [vmem:[%s180 + $0x8a8] sm:$0xff]
        %v484 = vld [vmem:[%s180 + $0x8b0] sm:$0xff]
        %v485 = vld [vmem:[%s180 + $0x8b8] sm:$0xff]
        %v486 = vld [vmem:[%s180 + $0x8c0] sm:$0xff]
        %v487 = vld [vmem:[%s180 + $0x8c8] sm:$0xff]
        %v488 = vld [vmem:[%s180 + $0x8d0] sm:$0xff]
        %v489 = vld [vmem:[%s180 + $0x8d8] sm:$0xff]
        %v490 = vld [vmem:[%s180 + $0x8e0] sm:$0xff]
        %v491 = vld [vmem:[%s180 + $0x8e8] sm:$0xff]
        %v492 = vld [vmem:[%s180 + $0x8f0] sm:$0xff]
        %v493 = vld [vmem:[%s180 + $0x8f8] sm:$0xff]
        %v494 = vld [vmem:[%s180 + $0x900] sm:$0xff]
        %v495 = vld [vmem:[%s180 + $0x908] sm:$0xff]
        %v496 = vld [vmem:[%s180 + $0x910] sm:$0xff]
        %v497 = vld [vmem:[%s180 + $0x918] sm:$0xff]
        %v498 = vld [vmem:[%s180 + $0x920] sm:$0xff]
        %v499 = vld [vmem:[%s180 + $0x928] sm:$0xff]
        %v500 = vld [vmem:[%s180 + $0x930] sm:$0xff]
        %v501 = vld [vmem:[%s180 + $0x938] sm:$0xff]
        %v502 = vld [vmem:[%s180 + $0x940] sm:$0xff]
        %v503 = vld [vmem:[%s180 + $0x948] sm:$0xff]
        %v504 = vld [vmem:[%s180 + $0x950] sm:$0xff]
        %v505 = vld [vmem:[%s180 + $0x958] sm:$0xff]
        %v506 = vld [vmem:[%s180 + $0x960] sm:$0xff]
        %v507 = vld [vmem:[%s180 + $0x968] sm:$0xff]
        %v508 = vld [vmem:[%s180 + $0x970] sm:$0xff]
        %v509 = vld [vmem:[%s180 + $0x978] sm:$0xff]
        %v510 = vld [vmem:[%s180 + $0x980] sm:$0xff]
        %v511 = vld [vmem:[%s180 + $0x988] sm:$0xff]
        %v512 = vld [vmem:[%s180 + $0x990] sm:$0xff]
        %v513 = vld [vmem:[%s180 + $0x998] sm:$0xff]
        %v514 = vld [vmem:[%s180 + $0x9a0] sm:$0xff]
        %v515 = vld [vmem:[%s180 + $0x9a8] sm:$0xff]
        %v516 = vld [vmem:[%s180 + $0x9b0] sm:$0xff]
        %v517 = vld [vmem:[%s180 + $0x9b8] sm:$0xff]
        %v518 = vld [vmem:[%s180 + $0x9c0] sm:$0xff]
        %v519 = vld [vmem:[%s180 + $0x9c8] sm:$0xff]
        %v520 = vld [vmem:[%s180 + $0x9d0] sm:$0xff]
        %v521 = vld [vmem:[%s180 + $0x9d8] sm:$0xff]
        %v522 = vld [vmem:[%s180 + $0x9e0] sm:$0xff]
        %v523 = vld [vmem:[%s180 + $0x9e8] sm:$0xff]
        %v524 = vld [vmem:[%s180 + $0x9f0] sm:$0xff]
        %v525 = vld [vmem:[%s180 + $0x9f8] sm:$0xff]
        %v526 = vld [vmem:[%s180 + $0xa00] sm:$0xff]
        %v527 = vld [vmem:[%s180 + $0xa08] sm:$0xff]
        %v528 = vld [vmem:[%s180 + $0xa10] sm:$0xff]
        %v529 = vld [vmem:[%s180 + $0xa18] sm:$0xff]
        %v530 = vld [vmem:[%s180 + $0xa20] sm:$0xff]
        %v531 = vld [vmem:[%s180 + $0xa28] sm:$0xff]
        %v532 = vld [vmem:[%s180 + $0xa30] sm:$0xff]
        %v533 = vld [vmem:[%s180 + $0xa38] sm:$0xff]
        %v534 = vld [vmem:[%s180 + $0xa40] sm:$0xff]
        %v535 = vld [vmem:[%s180 + $0xa48] sm:$0xff]
        %v536 = vld [vmem:[%s180 + $0xa50] sm:$0xff]
        %v537 = vld [vmem:[%s180 + $0xa58] sm:$0xff]
        %v538 = vld [vmem:[%s180 + $0xa60] sm:$0xff]
        %v539 = vld [vmem:[%s180 + $0xa68] sm:$0xff]
        %v540 = vld [vmem:[%s180 + $0xa70] sm:$0xff]
        %v541 = vld [vmem:[%s180 + $0xa78] sm:$0xff]
        %v542 = vld [vmem:[%s180 + $0xa80] sm:$0xff]
        %v543 = vld [vmem:[%s180 + $0xa88] sm:$0xff]
        %v544 = vld [vmem:[%s180 + $0xa90] sm:$0xff]
        %v545 = vld [vmem:[%s180 + $0xa98] sm:$0xff]
        %v546 = vld [vmem:[%s180 + $0xaa0] sm:$0xff]
        %v547 = vld [vmem:[%s180 + $0xaa8] sm:$0xff]
        %v548 = vld [vmem:[%s180 + $0xab0] sm:$0xff]
        %v549 = vld [vmem:[%s180 + $0xab8] sm:$0xff]
        %v550 = vld [vmem:[%s180 + $0xac0] sm:$0xff]
        %v551 = vld [vmem:[%s180 + $0xac8] sm:$0xff]
        %v552 = vld [vmem:[%s180 + $0xad0] sm:$0xff]
        %v553 = vld [vmem:[%s180 + $0xad8] sm:$0xff]
        %v554 = vld [vmem:[%s180 + $0xae0] sm:$0xff]
        %v555 = vld [vmem:[%s180 + $0xae8] sm:$0xff]
        %v556 = vld [vmem:[%s180 + $0xaf0] sm:$0xff]
        %v557 = vld [vmem:[%s180 + $0xaf8] sm:$0xff]
        %v558 = vld [vmem:[%s180 + $0xb00] sm:$0xff]
        %v559 = vld [vmem:[%s180 + $0xb08] sm:$0xff]
        %v560 = vld [vmem:[%s180 + $0xb10] sm:$0xff]
        %v561 = vld [vmem:[%s180 + $0xb18] sm:$0xff]
        %v562 = vld [vmem:[%s180 + $0xb20] sm:$0xff]
        %v563 = vld [vmem:[%s180 + $0xb28] sm:$0xff]
        %v564 = vld [vmem:[%s180 + $0xb30] sm:$0xff]
        %v565 = vld [vmem:[%s180 + $0xb38] sm:$0xff]
        %v566 = vld [vmem:[%s180 + $0xb40] sm:$0xff]
        %v567 = vld [vmem:[%s180 + $0xb48] sm:$0xff]
        %v568 = vld [vmem:[%s180 + $0xb50] sm:$0xff]
        %v569 = vld [vmem:[%s180 + $0xb58] sm:$0xff]
        %v570 = vld [vmem:[%s180 + $0xb60] sm:$0xff]
        %v571 = vld [vmem:[%s180 + $0xb68] sm:$0xff]
        %v572 = vld [vmem:[%s180 + $0xb70] sm:$0xff]
        %v573 = vld [vmem:[%s180 + $0xb78] sm:$0xff]
        %v574 = vld [vmem:[%s180 + $0xb80] sm:$0xff]
        %v575 = vld [vmem:[%s180 + $0xb88] sm:$0xff]
        %v576 = vld [vmem:[%s180 + $0xb90] sm:$0xff]
        %v577 = vld [vmem:[%s180 + $0xb98] sm:$0xff]
        %v578 = vld [vmem:[%s180 + $0xba0] sm:$0xff]
        %v579 = vld [vmem:[%s180 + $0xba8] sm:$0xff]
        %v580 = vld [vmem:[%s180 + $0xbb0] sm:$0xff]
        %v581 = vld [vmem:[%s180 + $0xbb8] sm:$0xff]
        %v582 = vld [vmem:[%s180 + $0xbc0] sm:$0xff]
        %v583 = vld [vmem:[%s180 + $0xbc8] sm:$0xff]
        %v584 = vld [vmem:[%s180 + $0xbd0] sm:$0xff]
        %v585 = vld [vmem:[%s180 + $0xbd8] sm:$0xff]
        %v586 = vld [vmem:[%s180 + $0xbe0] sm:$0xff]
        %v587 = vld [vmem:[%s180 + $0xbe8] sm:$0xff]
        %v588 = vld [vmem:[%s180 + $0xbf0] sm:$0xff]
        %v589 = vld [vmem:[%s180 + $0xbf8] sm:$0xff]
        %v590 = vld [vmem:[%s180 + $0xc00] sm:$0xff]
        %v591 = vld [vmem:[%s180 + $0xc08] sm:$0xff]
        %v592 = vld [vmem:[%s180 + $0xc10] sm:$0xff]
        %v593 = vld [vmem:[%s180 + $0xc18] sm:$0xff]
        %v594 = vld [vmem:[%s180 + $0xc20] sm:$0xff]
        %v595 = vld [vmem:[%s180 + $0xc28] sm:$0xff]
        %v596 = vld [vmem:[%s180 + $0xc30] sm:$0xff]
        %v597 = vld [vmem:[%s180 + $0xc38] sm:$0xff]
        %v598 = vld [vmem:[%s180 + $0xc40] sm:$0xff]
        %v599 = vld [vmem:[%s180 + $0xc48] sm:$0xff]
        %v600 = vld [vmem:[%s180 + $0xc50] sm:$0xff]
        %v601 = vld [vmem:[%s180 + $0xc58] sm:$0xff]
        %v602 = vld [vmem:[%s180 + $0xc60] sm:$0xff]
        %v603 = vld [vmem:[%s180 + $0xc68] sm:$0xff]
        %v604 = vld [vmem:[%s180 + $0xc70] sm:$0xff]
        %v605 = vld [vmem:[%s180 + $0xc78] sm:$0xff]
        %v606 = vld [vmem:[%s180 + $0xc80] sm:$0xff]
        %v607 = vld [vmem:[%s180 + $0xc88] sm:$0xff]
        %v608 = vld [vmem:[%s180 + $0xc90] sm:$0xff]
        %v609 = vld [vmem:[%s180 + $0xc98] sm:$0xff]
        %v610 = vld [vmem:[%s180 + $0xca0] sm:$0xff]
        %v611 = vld [vmem:[%s180 + $0xca8] sm:$0xff]
        %v612 = vld [vmem:[%s180 + $0xcb0] sm:$0xff]
        %v613 = vld [vmem:[%s180 + $0xcb8] sm:$0xff]
        %v614 = vld [vmem:[%s180 + $0xcc0] sm:$0xff]
        %v615 = vld [vmem:[%s180 + $0xcc8] sm:$0xff]
        %v616 = vld [vmem:[%s180 + $0xcd0] sm:$0xff]
        %v617 = vld [vmem:[%s180 + $0xcd8] sm:$0xff]
        %v618 = vld [vmem:[%s180 + $0xce0] sm:$0xff]
        %v619 = vld [vmem:[%s180 + $0xce8] sm:$0xff]
        %v620 = vld [vmem:[%s180 + $0xcf0] sm:$0xff]
        %v621 = vld [vmem:[%s180 + $0xcf8] sm:$0xff]
        %v622 = vld [vmem:[%s180 + $0xd00] sm:$0xff]
        %v623 = vld [vmem:[%s180 + $0xd08] sm:$0xff]
        %v624 = vld [vmem:[%s180 + $0xd10] sm:$0xff]
        %v625 = vld [vmem:[%s180 + $0xd18] sm:$0xff]
        %v626 = vld [vmem:[%s180 + $0xd20] sm:$0xff]
        %v627 = vld [vmem:[%s180 + $0xd28] sm:$0xff]
        %v628 = vld [vmem:[%s180 + $0xd30] sm:$0xff]
        %v629 = vld [vmem:[%s180 + $0xd38] sm:$0xff]
        %v630 = vld [vmem:[%s180 + $0xd40] sm:$0xff]
        %v631 = vld [vmem:[%s180 + $0xd48] sm:$0xff]
        %v632 = vld [vmem:[%s180 + $0xd50] sm:$0xff]
        %v633 = vld [vmem:[%s180 + $0xd58] sm:$0xff]
        %v634 = vld [vmem:[%s180 + $0xd60] sm:$0xff]
        %v635 = vld [vmem:[%s180 + $0xd68] sm:$0xff]
        %v636 = vld [vmem:[%s180 + $0xd70] sm:$0xff]
        %v637 = vld [vmem:[%s180 + $0xd78] sm:$0xff]
        %v638 = vld [vmem:[%s180 + $0xd80] sm:$0xff]
        %v639 = vld [vmem:[%s180 + $0xd88] sm:$0xff]
        %v640 = vld [vmem:[%s180 + $0xd90] sm:$0xff]
        %v641 = vld [vmem:[%s180 + $0xd98] sm:$0xff]
        %v642 = vld [vmem:[%s180 + $0xda0] sm:$0xff]
        %v643 = vld [vmem:[%s180 + $0xda8] sm:$0xff]
        %v644 = vld [vmem:[%s180 + $0xdb0] sm:$0xff]
        %v645 = vld [vmem:[%s180 + $0xdb8] sm:$0xff]
        %v646 = vld [vmem:[%s180 + $0xdc0] sm:$0xff]
        %v647 = vld [vmem:[%s180 + $0xdc8] sm:$0xff]
        %v648 = vld [vmem:[%s180 + $0xdd0] sm:$0xff]
        %v649 = vld [vmem:[%s180 + $0xdd8] sm:$0xff]
        %v650 = vld [vmem:[%s180 + $0xde0] sm:$0xff]
        %v651 = vld [vmem:[%s180 + $0xde8] sm:$0xff]
        %v652 = vld [vmem:[%s180 + $0xdf0] sm:$0xff]
        %v653 = vld [vmem:[%s180 + $0xdf8] sm:$0xff]
        %v654 = vld [vmem:[%s180 + $0xe00] sm:$0xff]
        %v655 = vld [vmem:[%s180 + $0xe08] sm:$0xff]
        %v656 = vld [vmem:[%s180 + $0xe10] sm:$0xff]
        %v657 = vld [vmem:[%s180 + $0xe18] sm:$0xff]
        %v658 = vld [vmem:[%s180 + $0xe20] sm:$0xff]
        %v659 = vld [vmem:[%s180 + $0xe28] sm:$0xff]
        %v660 = vld [vmem:[%s180 + $0xe30] sm:$0xff]
        %v661 = vld [vmem:[%s180 + $0xe38] sm:$0xff]
        %v662 = vld [vmem:[%s180 + $0xe40] sm:$0xff]
        %v663 = vld [vmem:[%s180 + $0xe48] sm:$0xff]
        %v664 = vld [vmem:[%s180 + $0xe50] sm:$0xff]
        %v665 = vld [vmem:[%s180 + $0xe58] sm:$0xff]
        %v666 = vld [vmem:[%s180 + $0xe60] sm:$0xff]
        %v667 = vld [vmem:[%s180 + $0xe68] sm:$0xff]
        %v668 = vld [vmem:[%s180 + $0xe70] sm:$0xff]
        %v669 = vld [vmem:[%s180 + $0xe78] sm:$0xff]
        %v670 = vld [vmem:[%s180 + $0xe80] sm:$0xff]
        %v671 = vld [vmem:[%s180 + $0xe88] sm:$0xff]
        %v672 = vld [vmem:[%s180 + $0xe90] sm:$0xff]
        %v673 = vld [vmem:[%s180 + $0xe98] sm:$0xff]
        %v674 = vld [vmem:[%s180 + $0xea0] sm:$0xff]
        %v675 = vld [vmem:[%s180 + $0xea8] sm:$0xff]
        %v676 = vld [vmem:[%s180 + $0xeb0] sm:$0xff]
        %v677 = vld [vmem:[%s180 + $0xeb8] sm:$0xff]
        %v678 = vld [vmem:[%s180 + $0xec0] sm:$0xff]
        %v679 = vld [vmem:[%s180 + $0xec8] sm:$0xff]
        %v680 = vld [vmem:[%s180 + $0xed0] sm:$0xff]
        %v681 = vld [vmem:[%s180 + $0xed8] sm:$0xff]
        %v682 = vld [vmem:[%s180 + $0xee0] sm:$0xff]
        %v683 = vld [vmem:[%s180 + $0xee8] sm:$0xff]
        %v684 = vld [vmem:[%s180 + $0xef0] sm:$0xff]
        %v685 = vld [vmem:[%s180 + $0xef8] sm:$0xff]
        %v686 = vld [vmem:[%s180 + $0xf00] sm:$0xff]
        %v687 = vld [vmem:[%s180 + $0xf08] sm:$0xff]
        %v688 = vld [vmem:[%s180 + $0xf10] sm:$0xff]
        %v689 = vld [vmem:[%s180 + $0xf18] sm:$0xff]
        %v690 = vld [vmem:[%s180 + $0xf20] sm:$0xff]
        %v691 = vld [vmem:[%s180 + $0xf28] sm:$0xff]
        %v692 = vld [vmem:[%s180 + $0xf30] sm:$0xff]
        %v693 = vld [vmem:[%s180 + $0xf38] sm:$0xff]
        %v694 = vld [vmem:[%s180 + $0xf40] sm:$0xff]
        %v695 = vld [vmem:[%s180 + $0xf48] sm:$0xff]
        %v696 = vld [vmem:[%s180 + $0xf50] sm:$0xff]
        %v697 = vld [vmem:[%s180 + $0xf58] sm:$0xff]
        %v698 = vld [vmem:[%s180 + $0xf60] sm:$0xff]
        %v699 = vld [vmem:[%s180 + $0xf68] sm:$0xff]
        %v700 = vld [vmem:[%s180 + $0xf70] sm:$0xff]
        %v701 = vld [vmem:[%s180 + $0xf78] sm:$0xff]
        %v702 = vld [vmem:[%s180 + $0xf80] sm:$0xff]
        %v703 = vld [vmem:[%s180 + $0xf88] sm:$0xff]
        %v704 = vld [vmem:[%s180 + $0xf90] sm:$0xff]
        %v705 = vld [vmem:[%s180 + $0xf98] sm:$0xff]
        %v706 = vld [vmem:[%s180 + $0xfa0] sm:$0xff]
        %v707 = vld [vmem:[%s180 + $0xfa8] sm:$0xff]
        %v708 = vld [vmem:[%s180 + $0xfb0] sm:$0xff]
        %v709 = vld [vmem:[%s180 + $0xfb8] sm:$0xff]
        %v710 = vld [vmem:[%s180 + $0xfc0] sm:$0xff]
        %v711 = vld [vmem:[%s180 + $0xfc8] sm:$0xff]
        %v712 = vld [vmem:[%s180 + $0xfd0] sm:$0xff]
        %v713 = vld [vmem:[%s180 + $0xfd8] sm:$0xff]
        %v714 = vld [vmem:[%s180 + $0xfe0] sm:$0xff]
        %v715 = vld [vmem:[%s180 + $0xfe8] sm:$0xff]
        %v716 = vld [vmem:[%s180 + $0xff0] sm:$0xff]
        %v717 = vld [vmem:[%s180 + $0xff8] sm:$0xff]
        %v718 = vstv %s205
        %v721 = vlaneseq
        %v722 = vshrl.u32 %v721, 7
        %v723 = vsub.s32 0, %v722
        %v724 = vrot.slane %v203, %v723
        %v725 = vlaneseq
        %v726 = vshrl.u32 %v725, 7
        %v727 = vsub.s32 1, %v726
        %v728 = vrot.slane %v203, %v727
        %v729 = vlaneseq
        %v730 = vshrl.u32 %v729, 7
        %v731 = vsub.s32 2, %v730
        %v732 = vrot.slane %v203, %v731
        %v733 = vlaneseq
        %v734 = vshrl.u32 %v733, 7
        %v735 = vsub.s32 3, %v734
        %v736 = vrot.slane %v203, %v735
        %v737 = vlaneseq
        %v738 = vshrl.u32 %v737, 7
        %v739 = vsub.s32 4, %v738
        %v740 = vrot.slane %v203, %v739
        %v741 = vlaneseq
        %v742 = vshrl.u32 %v741, 7
        %v743 = vsub.s32 5, %v742
        %v744 = vrot.slane %v203, %v743
        %v745 = vlaneseq
        %v746 = vshrl.u32 %v745, 7
        %v747 = vsub.s32 6, %v746
        %v748 = vrot.slane %v203, %v747
        %v749 = vlaneseq
        %v750 = vshrl.u32 %v749, 7
        %v751 = vsub.s32 7, %v750
        %v752 = vrot.slane %v203, %v751
        %v753 = vlaneseq
        %v754 = vshrl.u32 %v753, 7
        %v755 = vsub.s32 0, %v754
        %v756 = vrot.slane %v204, %v755
        %v757 = vlaneseq
        %v758 = vshrl.u32 %v757, 7
        %v759 = vsub.s32 1, %v758
        %v760 = vrot.slane %v204, %v759
        %v761 = vlaneseq
        %v762 = vshrl.u32 %v761, 7
        %v763 = vsub.s32 2, %v762
        %v764 = vrot.slane %v204, %v763
        %v765 = vlaneseq
        %v766 = vshrl.u32 %v765, 7
        %v767 = vsub.s32 3, %v766
        %v768 = vrot.slane %v204, %v767
        %v769 = vlaneseq
        %v770 = vshrl.u32 %v769, 7
        %v771 = vsub.s32 4, %v770
        %v772 = vrot.slane %v204, %v771
        %v773 = vlaneseq
        %v774 = vshrl.u32 %v773, 7
        %v775 = vsub.s32 5, %v774
        %v776 = vrot.slane %v204, %v775
        %v777 = vlaneseq
        %v778 = vshrl.u32 %v777, 7
        %v779 = vsub.s32 6, %v778
        %v780 = vrot.slane %v204, %v779
        %v781 = vlaneseq
        %v782 = vshrl.u32 %v781, 7
        %v783 = vsub.s32 7, %v782
        %v784 = vrot.slane %v204, %v783
        %801 = vmatprep.subr.mxu0 %v237
        %802 = vmatpush1.msra.mxu0 %v236
        %803 = vmatprep.subr.mxu0 %v235
        %804 = vmatpush1.msra.mxu0 %v234
        %805 = vmatprep.subr.mxu0 %v233
        %806 = vmatpush1.msra.mxu0 %v232
        %807 = vmatprep.subr.mxu0 %v231
        %808 = vmatpush1.msra.mxu0 %v230
        %809 = vmatprep.subr.mxu0 %v229
        %810 = vmatpush1.msra.mxu0 %v228
        %811 = vmatprep.subr.mxu0 %v227
        %812 = vmatpush1.msra.mxu0 %v226
        %813 = vmatprep.subr.mxu0 %v225
        %814 = vmatpush1.msra.mxu0 %v224
        %815 = vmatprep.subr.mxu0 %v223
        %816 = vmatpush1.msra.mxu0 %v222
        %817 = vmatprep.subr.mxu0 %v221
        %818 = vmatpush1.msra.mxu0 %v220
        %819 = vmatprep.subr.mxu0 %v219
        %820 = vmatpush1.msra.mxu0 %v218
        %821 = vmatprep.subr.mxu0 %v217
        %822 = vmatpush1.msra.mxu0 %v216
        %823 = vmatprep.subr.mxu0 %v215
        %824 = vmatpush1.msra.mxu0 %v214
        %825 = vmatprep.subr.mxu0 %v213
        %826 = vmatpush1.msra.mxu0 %v212
        %827 = vmatprep.subr.mxu0 %v211
        %828 = vmatpush1.msra.mxu0 %v210
        %829 = vmatprep.subr.mxu0 %v209
        %830 = vmatpush1.msra.mxu0 %v208
        %831 = vmatprep.subr.mxu0 %v207
        %832 = vmatpush1.msra.mxu0 %v206
        %833 = vmatprep.subr.mxu0 %v269
        %834 = vmatpush2.msra.mxu0 %v268
        %835 = vmatprep.subr.mxu0 %v267
        %836 = vmatpush2.msra.mxu0 %v266
        %837 = vmatprep.subr.mxu0 %v265
        %838 = vmatpush2.msra.mxu0 %v264
        %839 = vmatprep.subr.mxu0 %v263
        %840 = vmatpush2.msra.mxu0 %v262
        %841 = vmatprep.subr.mxu0 %v261
        %842 = vmatpush2.msra.mxu0 %v260
        %843 = vmatprep.subr.mxu0 %v259
        %844 = vmatpush2.msra.mxu0 %v258
        %845 = vmatprep.subr.mxu0 %v257
        %846 = vmatpush2.msra.mxu0 %v256
        %847 = vmatprep.subr.mxu0 %v255
        %848 = vmatpush2.msra.mxu0 %v254
        %849 = vmatprep.subr.mxu0 %v253
        %850 = vmatpush2.msra.mxu0 %v252
        %851 = vmatprep.subr.mxu0 %v251
        %852 = vmatpush2.msra.mxu0 %v250
        %853 = vmatprep.subr.mxu0 %v249
        %854 = vmatpush2.msra.mxu0 %v248
        %855 = vmatprep.subr.mxu0 %v247
        %856 = vmatpush2.msra.mxu0 %v246
        %857 = vmatprep.subr.mxu0 %v245
        %858 = vmatpush2.msra.mxu0 %v244
        %859 = vmatprep.subr.mxu0 %v243
        %860 = vmatpush2.msra.mxu0 %v242
        %861 = vmatprep.subr.mxu0 %v241
        %862 = vmatpush2.msra.mxu0 %v240
        %863 = vmatprep.subr.mxu0 %v239
        %864 = vmatpush2.msra.mxu0 %v238
        %865 = vmatprep.mubr.f32.mxu0 %v728
        %866 = vmatmul.mubr.f32.gmra.mxu0 %v724
        %v867 = vpop.f32.mrf.mxu0
        %v868 = vadd.f32 %v718, %v867
        %v869 = vpop.f32.mrf.mxu0
        %v870 = vadd.f32 %v718, %v869
        %871 = vdwg.mxu0
        %872 = vmatprep.subr.mxu0 %v301
        %873 = vmatpush1.msra.mxu0 %v300
        %874 = vmatprep.subr.mxu0 %v299
        %875 = vmatpush1.msra.mxu0 %v298
        %876 = vmatprep.subr.mxu0 %v297
        %877 = vmatpush1.msra.mxu0 %v296
        %878 = vmatprep.subr.mxu0 %v295
        %879 = vmatpush1.msra.mxu0 %v294
        %880 = vmatprep.subr.mxu0 %v293
        %881 = vmatpush1.msra.mxu0 %v292
        %882 = vmatprep.subr.mxu0 %v291
        %883 = vmatpush1.msra.mxu0 %v290
        %884 = vmatprep.subr.mxu0 %v289
        %885 = vmatpush1.msra.mxu0 %v288
        %886 = vmatprep.subr.mxu0 %v287
        %887 = vmatpush1.msra.mxu0 %v286
        %888 = vmatprep.subr.mxu0 %v285
        %889 = vmatpush1.msra.mxu0 %v284
        %890 = vmatprep.subr.mxu0 %v283
        %891 = vmatpush1.msra.mxu0 %v282
        %892 = vmatprep.subr.mxu0 %v281
        %893 = vmatpush1.msra.mxu0 %v280
        %894 = vmatprep.subr.mxu0 %v279
        %895 = vmatpush1.msra.mxu0 %v278
        %896 = vmatprep.subr.mxu0 %v277
        %897 = vmatpush1.msra.mxu0 %v276
        %898 = vmatprep.subr.mxu0 %v275
        %899 = vmatpush1.msra.mxu0 %v274
        %900 = vmatprep.subr.mxu0 %v273
        %901 = vmatpush1.msra.mxu0 %v272
        %902 = vmatprep.subr.mxu0 %v271
        %903 = vmatpush1.msra.mxu0 %v270
        %904 = vmatprep.subr.mxu0 %v333
        %905 = vmatpush2.msra.mxu0 %v332
        %906 = vmatprep.subr.mxu0 %v331
        %907 = vmatpush2.msra.mxu0 %v330
        %908 = vmatprep.subr.mxu0 %v329
        %909 = vmatpush2.msra.mxu0 %v328
        %910 = vmatprep.subr.mxu0 %v327
        %911 = vmatpush2.msra.mxu0 %v326
        %912 = vmatprep.subr.mxu0 %v325
        %913 = vmatpush2.msra.mxu0 %v324
        %914 = vmatprep.subr.mxu0 %v323
        %915 = vmatpush2.msra.mxu0 %v322
        %916 = vmatprep.subr.mxu0 %v321
        %917 = vmatpush2.msra.mxu0 %v320
        %918 = vmatprep.subr.mxu0 %v319
        %919 = vmatpush2.msra.mxu0 %v318
        %920 = vmatprep.subr.mxu0 %v317
        %921 = vmatpush2.msra.mxu0 %v316
        %922 = vmatprep.subr.mxu0 %v315
        %923 = vmatpush2.msra.mxu0 %v314
        %924 = vmatprep.subr.mxu0 %v313
        %925 = vmatpush2.msra.mxu0 %v312
        %926 = vmatprep.subr.mxu0 %v311
        %927 = vmatpush2.msra.mxu0 %v310
        %928 = vmatprep.subr.mxu0 %v309
        %929 = vmatpush2.msra.mxu0 %v308
        %930 = vmatprep.subr.mxu0 %v307
        %931 = vmatpush2.msra.mxu0 %v306
        %932 = vmatprep.subr.mxu0 %v305
        %933 = vmatpush2.msra.mxu0 %v304
        %934 = vmatprep.subr.mxu0 %v303
        %935 = vmatpush2.msra.mxu0 %v302
        %936 = vmatprep.mubr.f32.mxu0 %v736
        %937 = vmatmul.mubr.f32.gmra.mxu0 %v732
        %v938 = vpop.f32.mrf.mxu0
        %v939 = vadd.f32 %v868, %v938
        %v940 = vpop.f32.mrf.mxu0
        %v941 = vadd.f32 %v870, %v940
        %942 = vdwg.mxu0
        %943 = vmatprep.subr.mxu0 %v365
        %944 = vmatpush1.msra.mxu0 %v364
        %945 = vmatprep.subr.mxu0 %v363
        %946 = vmatpush1.msra.mxu0 %v362
        %947 = vmatprep.subr.mxu0 %v361
        %948 = vmatpush1.msra.mxu0 %v360
        %949 = vmatprep.subr.mxu0 %v359
        %950 = vmatpush1.msra.mxu0 %v358
        %951 = vmatprep.subr.mxu0 %v357
        %952 = vmatpush1.msra.mxu0 %v356
        %953 = vmatprep.subr.mxu0 %v355
        %954 = vmatpush1.msra.mxu0 %v354
        %955 = vmatprep.subr.mxu0 %v353
        %956 = vmatpush1.msra.mxu0 %v352
        %957 = vmatprep.subr.mxu0 %v351
        %958 = vmatpush1.msra.mxu0 %v350
        %959 = vmatprep.subr.mxu0 %v349
        %960 = vmatpush1.msra.mxu0 %v348
        %961 = vmatprep.subr.mxu0 %v347
        %962 = vmatpush1.msra.mxu0 %v346
        %963 = vmatprep.subr.mxu0 %v345
        %964 = vmatpush1.msra.mxu0 %v344
        %965 = vmatprep.subr.mxu0 %v343
        %966 = vmatpush1.msra.mxu0 %v342
        %967 = vmatprep.subr.mxu0 %v341
        %968 = vmatpush1.msra.mxu0 %v340
        %969 = vmatprep.subr.mxu0 %v339
        %970 = vmatpush1.msra.mxu0 %v338
        %971 = vmatprep.subr.mxu0 %v337
        %972 = vmatpush1.msra.mxu0 %v336
        %973 = vmatprep.subr.mxu0 %v335
        %974 = vmatpush1.msra.mxu0 %v334
        %975 = vmatprep.subr.mxu0 %v397
        %976 = vmatpush2.msra.mxu0 %v396
        %977 = vmatprep.subr.mxu0 %v395
        %978 = vmatpush2.msra.mxu0 %v394
        %979 = vmatprep.subr.mxu0 %v393
        %980 = vmatpush2.msra.mxu0 %v392
        %981 = vmatprep.subr.mxu0 %v391
        %982 = vmatpush2.msra.mxu0 %v390
        %983 = vmatprep.subr.mxu0 %v389
        %984 = vmatpush2.msra.mxu0 %v388
        %985 = vmatprep.subr.mxu0 %v387
        %986 = vmatpush2.msra.mxu0 %v386
        %987 = vmatprep.subr.mxu0 %v385
        %988 = vmatpush2.msra.mxu0 %v384
        %989 = vmatprep.subr.mxu0 %v383
        %990 = vmatpush2.msra.mxu0 %v382
        %991 = vmatprep.subr.mxu0 %v381
        %992 = vmatpush2.msra.mxu0 %v380
        %993 = vmatprep.subr.mxu0 %v379
        %994 = vmatpush2.msra.mxu0 %v378
        %995 = vmatprep.subr.mxu0 %v377
        %996 = vmatpush2.msra.mxu0 %v376
        %997 = vmatprep.subr.mxu0 %v375
        %998 = vmatpush2.msra.mxu0 %v374
        %999 = vmatprep.subr.mxu0 %v373
        %1000 = vmatpush2.msra.mxu0 %v372
        %1001 = vmatprep.subr.mxu0 %v371
        %1002 = vmatpush2.msra.mxu0 %v370
        %1003 = vmatprep.subr.mxu0 %v369
        %1004 = vmatpush2.msra.mxu0 %v368
        %1005 = vmatprep.subr.mxu0 %v367
        %1006 = vmatpush2.msra.mxu0 %v366
        %1007 = vmatprep.mubr.f32.mxu0 %v744
        %1008 = vmatmul.mubr.f32.gmra.mxu0 %v740
        %v1009 = vpop.f32.mrf.mxu0
        %v1010 = vadd.f32 %v939, %v1009
        %v1011 = vpop.f32.mrf.mxu0
        %v1012 = vadd.f32 %v941, %v1011
        %1013 = vdwg.mxu0
        %1014 = vmatprep.subr.mxu0 %v429
        %1015 = vmatpush1.msra.mxu0 %v428
        %1016 = vmatprep.subr.mxu0 %v427
        %1017 = vmatpush1.msra.mxu0 %v426
        %1018 = vmatprep.subr.mxu0 %v425
        %1019 = vmatpush1.msra.mxu0 %v424
        %1020 = vmatprep.subr.mxu0 %v423
        %1021 = vmatpush1.msra.mxu0 %v422
        %1022 = vmatprep.subr.mxu0 %v421
        %1023 = vmatpush1.msra.mxu0 %v420
        %1024 = vmatprep.subr.mxu0 %v419
        %1025 = vmatpush1.msra.mxu0 %v418
        %1026 = vmatprep.subr.mxu0 %v417
        %1027 = vmatpush1.msra.mxu0 %v416
        %1028 = vmatprep.subr.mxu0 %v415
        %1029 = vmatpush1.msra.mxu0 %v414
        %1030 = vmatprep.subr.mxu0 %v413
        %1031 = vmatpush1.msra.mxu0 %v412
        %1032 = vmatprep.subr.mxu0 %v411
        %1033 = vmatpush1.msra.mxu0 %v410
        %1034 = vmatprep.subr.mxu0 %v409
        %1035 = vmatpush1.msra.mxu0 %v408
        %1036 = vmatprep.subr.mxu0 %v407
        %1037 = vmatpush1.msra.mxu0 %v406
        %1038 = vmatprep.subr.mxu0 %v405
        %1039 = vmatpush1.msra.mxu0 %v404
        %1040 = vmatprep.subr.mxu0 %v403
        %1041 = vmatpush1.msra.mxu0 %v402
        %1042 = vmatprep.subr.mxu0 %v401
        %1043 = vmatpush1.msra.mxu0 %v400
        %1044 = vmatprep.subr.mxu0 %v399
        %1045 = vmatpush1.msra.mxu0 %v398
        %1046 = vmatprep.subr.mxu0 %v461
        %1047 = vmatpush2.msra.mxu0 %v460
        %1048 = vmatprep.subr.mxu0 %v459
        %1049 = vmatpush2.msra.mxu0 %v458
        %1050 = vmatprep.subr.mxu0 %v457
        %1051 = vmatpush2.msra.mxu0 %v456
        %1052 = vmatprep.subr.mxu0 %v455
        %1053 = vmatpush2.msra.mxu0 %v454
        %1054 = vmatprep.subr.mxu0 %v453
        %1055 = vmatpush2.msra.mxu0 %v452
        %1056 = vmatprep.subr.mxu0 %v451
        %1057 = vmatpush2.msra.mxu0 %v450
        %1058 = vmatprep.subr.mxu0 %v449
        %1059 = vmatpush2.msra.mxu0 %v448
        %1060 = vmatprep.subr.mxu0 %v447
        %1061 = vmatpush2.msra.mxu0 %v446
        %1062 = vmatprep.subr.mxu0 %v445
        %1063 = vmatpush2.msra.mxu0 %v444
        %1064 = vmatprep.subr.mxu0 %v443
        %1065 = vmatpush2.msra.mxu0 %v442
        %1066 = vmatprep.subr.mxu0 %v441
        %1067 = vmatpush2.msra.mxu0 %v440
        %1068 = vmatprep.subr.mxu0 %v439
        %1069 = vmatpush2.msra.mxu0 %v438
        %1070 = vmatprep.subr.mxu0 %v437
        %1071 = vmatpush2.msra.mxu0 %v436
        %1072 = vmatprep.subr.mxu0 %v435
        %1073 = vmatpush2.msra.mxu0 %v434
        %1074 = vmatprep.subr.mxu0 %v433
        %1075 = vmatpush2.msra.mxu0 %v432
        %1076 = vmatprep.subr.mxu0 %v431
        %1077 = vmatpush2.msra.mxu0 %v430
        %1078 = vmatprep.mubr.f32.mxu0 %v752
        %1079 = vmatmul.mubr.f32.gmra.mxu0 %v748
        %v1080 = vpop.f32.mrf.mxu0
        %v1081 = vadd.f32 %v1010, %v1080
        %v1082 = vpop.f32.mrf.mxu0
        %v1083 = vadd.f32 %v1012, %v1082
        %1084 = vdwg.mxu0
        %1085 = vmatprep.subr.mxu0 %v493
        %1086 = vmatpush1.msra.mxu0 %v492
        %1087 = vmatprep.subr.mxu0 %v491
        %1088 = vmatpush1.msra.mxu0 %v490
        %1089 = vmatprep.subr.mxu0 %v489
        %1090 = vmatpush1.msra.mxu0 %v488
        %1091 = vmatprep.subr.mxu0 %v487
        %1092 = vmatpush1.msra.mxu0 %v486
        %1093 = vmatprep.subr.mxu0 %v485
        %1094 = vmatpush1.msra.mxu0 %v484
        %1095 = vmatprep.subr.mxu0 %v483
        %1096 = vmatpush1.msra.mxu0 %v482
        %1097 = vmatprep.subr.mxu0 %v481
        %1098 = vmatpush1.msra.mxu0 %v480
        %1099 = vmatprep.subr.mxu0 %v479
        %1100 = vmatpush1.msra.mxu0 %v478
        %1101 = vmatprep.subr.mxu0 %v477
        %1102 = vmatpush1.msra.mxu0 %v476
        %1103 = vmatprep.subr.mxu0 %v475
        %1104 = vmatpush1.msra.mxu0 %v474
        %1105 = vmatprep.subr.mxu0 %v473
        %1106 = vmatpush1.msra.mxu0 %v472
        %1107 = vmatprep.subr.mxu0 %v471
        %1108 = vmatpush1.msra.mxu0 %v470
        %1109 = vmatprep.subr.mxu0 %v469
        %1110 = vmatpush1.msra.mxu0 %v468
        %1111 = vmatprep.subr.mxu0 %v467
        %1112 = vmatpush1.msra.mxu0 %v466
        %1113 = vmatprep.subr.mxu0 %v465
        %1114 = vmatpush1.msra.mxu0 %v464
        %1115 = vmatprep.subr.mxu0 %v463
        %1116 = vmatpush1.msra.mxu0 %v462
        %1117 = vmatprep.subr.mxu0 %v525
        %1118 = vmatpush2.msra.mxu0 %v524
        %1119 = vmatprep.subr.mxu0 %v523
        %1120 = vmatpush2.msra.mxu0 %v522
        %1121 = vmatprep.subr.mxu0 %v521
        %1122 = vmatpush2.msra.mxu0 %v520
        %1123 = vmatprep.subr.mxu0 %v519
        %1124 = vmatpush2.msra.mxu0 %v518
        %1125 = vmatprep.subr.mxu0 %v517
        %1126 = vmatpush2.msra.mxu0 %v516
        %1127 = vmatprep.subr.mxu0 %v515
        %1128 = vmatpush2.msra.mxu0 %v514
        %1129 = vmatprep.subr.mxu0 %v513
        %1130 = vmatpush2.msra.mxu0 %v512
        %1131 = vmatprep.subr.mxu0 %v511
        %1132 = vmatpush2.msra.mxu0 %v510
        %1133 = vmatprep.subr.mxu0 %v509
        %1134 = vmatpush2.msra.mxu0 %v508
        %1135 = vmatprep.subr.mxu0 %v507
        %1136 = vmatpush2.msra.mxu0 %v506
        %1137 = vmatprep.subr.mxu0 %v505
        %1138 = vmatpush2.msra.mxu0 %v504
        %1139 = vmatprep.subr.mxu0 %v503
        %1140 = vmatpush2.msra.mxu0 %v502
        %1141 = vmatprep.subr.mxu0 %v501
        %1142 = vmatpush2.msra.mxu0 %v500
        %1143 = vmatprep.subr.mxu0 %v499
        %1144 = vmatpush2.msra.mxu0 %v498
        %1145 = vmatprep.subr.mxu0 %v497
        %1146 = vmatpush2.msra.mxu0 %v496
        %1147 = vmatprep.subr.mxu0 %v495
        %1148 = vmatpush2.msra.mxu0 %v494
        %1149 = vmatprep.mubr.f32.mxu0 %v760
        %1150 = vmatmul.mubr.f32.gmra.mxu0 %v756
        %v1151 = vpop.f32.mrf.mxu0
        %v1152 = vadd.f32 %v1081, %v1151
        %v1153 = vpop.f32.mrf.mxu0
        %v1154 = vadd.f32 %v1083, %v1153
        %1155 = vdwg.mxu0
        %1156 = vmatprep.subr.mxu0 %v557
        %1157 = vmatpush1.msra.mxu0 %v556
        %1158 = vmatprep.subr.mxu0 %v555
        %1159 = vmatpush1.msra.mxu0 %v554
        %1160 = vmatprep.subr.mxu0 %v553
        %1161 = vmatpush1.msra.mxu0 %v552
        %1162 = vmatprep.subr.mxu0 %v551
        %1163 = vmatpush1.msra.mxu0 %v550
        %1164 = vmatprep.subr.mxu0 %v549
        %1165 = vmatpush1.msra.mxu0 %v548
        %1166 = vmatprep.subr.mxu0 %v547
        %1167 = vmatpush1.msra.mxu0 %v546
        %1168 = vmatprep.subr.mxu0 %v545
        %1169 = vmatpush1.msra.mxu0 %v544
        %1170 = vmatprep.subr.mxu0 %v543
        %1171 = vmatpush1.msra.mxu0 %v542
        %1172 = vmatprep.subr.mxu0 %v541
        %1173 = vmatpush1.msra.mxu0 %v540
        %1174 = vmatprep.subr.mxu0 %v539
        %1175 = vmatpush1.msra.mxu0 %v538
        %1176 = vmatprep.subr.mxu0 %v537
        %1177 = vmatpush1.msra.mxu0 %v536
        %1178 = vmatprep.subr.mxu0 %v535
        %1179 = vmatpush1.msra.mxu0 %v534
        %1180 = vmatprep.subr.mxu0 %v533
        %1181 = vmatpush1.msra.mxu0 %v532
        %1182 = vmatprep.subr.mxu0 %v531
        %1183 = vmatpush1.msra.mxu0 %v530
        %1184 = vmatprep.subr.mxu0 %v529
        %1185 = vmatpush1.msra.mxu0 %v528
        %1186 = vmatprep.subr.mxu0 %v527
        %1187 = vmatpush1.msra.mxu0 %v526
        %1188 = vmatprep.subr.mxu0 %v589
        %1189 = vmatpush2.msra.mxu0 %v588
        %1190 = vmatprep.subr.mxu0 %v587
        %1191 = vmatpush2.msra.mxu0 %v586
        %1192 = vmatprep.subr.mxu0 %v585
        %1193 = vmatpush2.msra.mxu0 %v584
        %1194 = vmatprep.subr.mxu0 %v583
        %1195 = vmatpush2.msra.mxu0 %v582
        %1196 = vmatprep.subr.mxu0 %v581
        %1197 = vmatpush2.msra.mxu0 %v580
        %1198 = vmatprep.subr.mxu0 %v579
        %1199 = vmatpush2.msra.mxu0 %v578
        %1200 = vmatprep.subr.mxu0 %v577
        %1201 = vmatpush2.msra.mxu0 %v576
        %1202 = vmatprep.subr.mxu0 %v575
        %1203 = vmatpush2.msra.mxu0 %v574
        %1204 = vmatprep.subr.mxu0 %v573
        %1205 = vmatpush2.msra.mxu0 %v572
        %1206 = vmatprep.subr.mxu0 %v571
        %1207 = vmatpush2.msra.mxu0 %v570
        %1208 = vmatprep.subr.mxu0 %v569
        %1209 = vmatpush2.msra.mxu0 %v568
        %1210 = vmatprep.subr.mxu0 %v567
        %1211 = vmatpush2.msra.mxu0 %v566
        %1212 = vmatprep.subr.mxu0 %v565
        %1213 = vmatpush2.msra.mxu0 %v564
        %1214 = vmatprep.subr.mxu0 %v563
        %1215 = vmatpush2.msra.mxu0 %v562
        %1216 = vmatprep.subr.mxu0 %v561
        %1217 = vmatpush2.msra.mxu0 %v560
        %1218 = vmatprep.subr.mxu0 %v559
        %1219 = vmatpush2.msra.mxu0 %v558
        %1220 = vmatprep.mubr.f32.mxu0 %v768
        %1221 = vmatmul.mubr.f32.gmra.mxu0 %v764
        %v1222 = vpop.f32.mrf.mxu0
        %v1223 = vadd.f32 %v1152, %v1222
        %v1224 = vpop.f32.mrf.mxu0
        %v1225 = vadd.f32 %v1154, %v1224
        %1226 = vdwg.mxu0
        %1227 = vmatprep.subr.mxu0 %v621
        %1228 = vmatpush1.msra.mxu0 %v620
        %1229 = vmatprep.subr.mxu0 %v619
        %1230 = vmatpush1.msra.mxu0 %v618
        %1231 = vmatprep.subr.mxu0 %v617
        %1232 = vmatpush1.msra.mxu0 %v616
        %1233 = vmatprep.subr.mxu0 %v615
        %1234 = vmatpush1.msra.mxu0 %v614
        %1235 = vmatprep.subr.mxu0 %v613
        %1236 = vmatpush1.msra.mxu0 %v612
        %1237 = vmatprep.subr.mxu0 %v611
        %1238 = vmatpush1.msra.mxu0 %v610
        %1239 = vmatprep.subr.mxu0 %v609
        %1240 = vmatpush1.msra.mxu0 %v608
        %1241 = vmatprep.subr.mxu0 %v607
        %1242 = vmatpush1.msra.mxu0 %v606
        %1243 = vmatprep.subr.mxu0 %v605
        %1244 = vmatpush1.msra.mxu0 %v604
        %1245 = vmatprep.subr.mxu0 %v603
        %1246 = vmatpush1.msra.mxu0 %v602
        %1247 = vmatprep.subr.mxu0 %v601
        %1248 = vmatpush1.msra.mxu0 %v600
        %1249 = vmatprep.subr.mxu0 %v599
        %1250 = vmatpush1.msra.mxu0 %v598
        %1251 = vmatprep.subr.mxu0 %v597
        %1252 = vmatpush1.msra.mxu0 %v596
        %1253 = vmatprep.subr.mxu0 %v595
        %1254 = vmatpush1.msra.mxu0 %v594
        %1255 = vmatprep.subr.mxu0 %v593
        %1256 = vmatpush1.msra.mxu0 %v592
        %1257 = vmatprep.subr.mxu0 %v591
        %1258 = vmatpush1.msra.mxu0 %v590
        %1259 = vmatprep.subr.mxu0 %v653
        %1260 = vmatpush2.msra.mxu0 %v652
        %1261 = vmatprep.subr.mxu0 %v651
        %1262 = vmatpush2.msra.mxu0 %v650
        %1263 = vmatprep.subr.mxu0 %v649
        %1264 = vmatpush2.msra.mxu0 %v648
        %1265 = vmatprep.subr.mxu0 %v647
        %1266 = vmatpush2.msra.mxu0 %v646
        %1267 = vmatprep.subr.mxu0 %v645
        %1268 = vmatpush2.msra.mxu0 %v644
        %1269 = vmatprep.subr.mxu0 %v643
        %1270 = vmatpush2.msra.mxu0 %v642
        %1271 = vmatprep.subr.mxu0 %v641
        %1272 = vmatpush2.msra.mxu0 %v640
        %1273 = vmatprep.subr.mxu0 %v639
        %1274 = vmatpush2.msra.mxu0 %v638
        %1275 = vmatprep.subr.mxu0 %v637
        %1276 = vmatpush2.msra.mxu0 %v636
        %1277 = vmatprep.subr.mxu0 %v635
        %1278 = vmatpush2.msra.mxu0 %v634
        %1279 = vmatprep.subr.mxu0 %v633
        %1280 = vmatpush2.msra.mxu0 %v632
        %1281 = vmatprep.subr.mxu0 %v631
        %1282 = vmatpush2.msra.mxu0 %v630
        %1283 = vmatprep.subr.mxu0 %v629
        %1284 = vmatpush2.msra.mxu0 %v628
        %1285 = vmatprep.subr.mxu0 %v627
        %1286 = vmatpush2.msra.mxu0 %v626
        %1287 = vmatprep.subr.mxu0 %v625
        %1288 = vmatpush2.msra.mxu0 %v624
        %1289 = vmatprep.subr.mxu0 %v623
        %1290 = vmatpush2.msra.mxu0 %v622
        %1291 = vmatprep.mubr.f32.mxu0 %v776
        %1292 = vmatmul.mubr.f32.gmra.mxu0 %v772
        %v1293 = vpop.f32.mrf.mxu0
        %v1294 = vadd.f32 %v1223, %v1293
        %v1295 = vpop.f32.mrf.mxu0
        %v1296 = vadd.f32 %v1225, %v1295
        %1297 = vdwg.mxu0
        %1298 = vmatprep.subr.mxu0 %v685
        %1299 = vmatpush1.msra.mxu0 %v684
        %1300 = vmatprep.subr.mxu0 %v683
        %1301 = vmatpush1.msra.mxu0 %v682
        %1302 = vmatprep.subr.mxu0 %v681
        %1303 = vmatpush1.msra.mxu0 %v680
        %1304 = vmatprep.subr.mxu0 %v679
        %1305 = vmatpush1.msra.mxu0 %v678
        %1306 = vmatprep.subr.mxu0 %v677
        %1307 = vmatpush1.msra.mxu0 %v676
        %1308 = vmatprep.subr.mxu0 %v675
        %1309 = vmatpush1.msra.mxu0 %v674
        %1310 = vmatprep.subr.mxu0 %v673
        %1311 = vmatpush1.msra.mxu0 %v672
        %1312 = vmatprep.subr.mxu0 %v671
        %1313 = vmatpush1.msra.mxu0 %v670
        %1314 = vmatprep.subr.mxu0 %v669
        %1315 = vmatpush1.msra.mxu0 %v668
        %1316 = vmatprep.subr.mxu0 %v667
        %1317 = vmatpush1.msra.mxu0 %v666
        %1318 = vmatprep.subr.mxu0 %v665
        %1319 = vmatpush1.msra.mxu0 %v664
        %1320 = vmatprep.subr.mxu0 %v663
        %1321 = vmatpush1.msra.mxu0 %v662
        %1322 = vmatprep.subr.mxu0 %v661
        %1323 = vmatpush1.msra.mxu0 %v660
        %1324 = vmatprep.subr.mxu0 %v659
        %1325 = vmatpush1.msra.mxu0 %v658
        %1326 = vmatprep.subr.mxu0 %v657
        %1327 = vmatpush1.msra.mxu0 %v656
        %1328 = vmatprep.subr.mxu0 %v655
        %1329 = vmatpush1.msra.mxu0 %v654
        %1330 = vmatprep.subr.mxu0 %v717
        %1331 = vmatpush2.msra.mxu0 %v716
        %1332 = vmatprep.subr.mxu0 %v715
        %1333 = vmatpush2.msra.mxu0 %v714
        %1334 = vmatprep.subr.mxu0 %v713
        %1335 = vmatpush2.msra.mxu0 %v712
        %1336 = vmatprep.subr.mxu0 %v711
        %1337 = vmatpush2.msra.mxu0 %v710
        %1338 = vmatprep.subr.mxu0 %v709
        %1339 = vmatpush2.msra.mxu0 %v708
        %1340 = vmatprep.subr.mxu0 %v707
        %1341 = vmatpush2.msra.mxu0 %v706
        %1342 = vmatprep.subr.mxu0 %v705
        %1343 = vmatpush2.msra.mxu0 %v704
        %1344 = vmatprep.subr.mxu0 %v703
        %1345 = vmatpush2.msra.mxu0 %v702
        %1346 = vmatprep.subr.mxu0 %v701
        %1347 = vmatpush2.msra.mxu0 %v700
        %1348 = vmatprep.subr.mxu0 %v699
        %1349 = vmatpush2.msra.mxu0 %v698
        %1350 = vmatprep.subr.mxu0 %v697
        %1351 = vmatpush2.msra.mxu0 %v696
        %1352 = vmatprep.subr.mxu0 %v695
        %1353 = vmatpush2.msra.mxu0 %v694
        %1354 = vmatprep.subr.mxu0 %v693
        %1355 = vmatpush2.msra.mxu0 %v692
        %1356 = vmatprep.subr.mxu0 %v691
        %1357 = vmatpush2.msra.mxu0 %v690
        %1358 = vmatprep.subr.mxu0 %v689
        %1359 = vmatpush2.msra.mxu0 %v688
        %1360 = vmatprep.subr.mxu0 %v687
        %1361 = vmatpush2.msra.mxu0 %v686
        %1362 = vmatprep.mubr.f32.mxu0 %v784
        %1363 = vmatmul.mubr.f32.gmra.mxu0 %v780
        %v1364 = vpop.f32.mrf.mxu0
        %v1365 = vadd.f32 %v1294, %v1364
        %v1366 = vpop.f32.mrf.mxu0
        %v1367 = vadd.f32 %v1296, %v1366
        %1368 = vdwg.mxu0
        %v1371 = vcombine.low %v1365, %v1367
        %v1373 = vunpack.c.l.s4 1966171168
        %v1374 = vunpack.c.0.s8 %v1373
        %v1375 = vlaneseq
        %v1376 = vshrl.u32 %v1375, 7
        %v1377 = vsub.s32 %v1374, %v1376
        %v1378 = vrot.slane %v1371, %v1377
        %v1380 = vunpack.c.l.s4 1966171168
        %v1381 = vunpack.c.0.s8 %v1380
        %v1382 = vlaneseq
        %v1383 = vshrl.u32 %v1382, 7
        %v1384 = vsub.s32 %v1381, %v1383
        %v1385 = vrot.slane %v1378, %v1384
        %v1387 = vlaneseq
        %vm1388 = vcmp.ge.s32.totalorder %v1387, 0
        %vm1389 = vcmp.lt.s32.totalorder %v1387, 256
        %vm1390 = vmand %vm1388, %vm1389
        %1391 = vst.msk [vmem:[%s202] sm:$0x3] %vm1390, %v1385
        %s1392 = sand.u32 %s98, 1
        %s1393 = scalar_lea.sflag [#allocation5], %s1392
        %s1394 = sand.u32 %s98, 1
        %s1395 = smul.addr %s1394, 2
        %s1396 = scalar_lea.vmem [#allocation8], %s1395
        // Predicated region
        $region41: #{tpu_custom_call.1} parent=31 // pred_check
          %p1397 = pneg %p108
        $region42: #{tpu_custom_call.1} parent=31 // pred_check_branch
          %1399 = sbr.rel (%p1397) target = $region44
        $region43: #{tpu_custom_call.1} parent=31 // pred_region
          %s1401 = ssub.s32 32, 32
          %1402 = vsyncadd %s1393, %s1401
          %s1403 = smul.addr %s22, 2
          %s1404 = smul.addr %s1403, 16
          %s1405 = scalar_lea.hbm %s3, %s1404
          %s1407 = sshll.u32 %s1396, 4
          %s1408 = int_to_ptr.vmem [resolvable:$true] %s1407
          %1410 = dma.vmem_to_hbm [thread:$0]  %s1408, 32, %s1405, %s1393
        $region44: #{tpu_custom_call.1} parent=31 // pred_fallthru
          _
      $region32: #{tpu_custom_call.1} parent=5 // pred_fallthru
        _
      %p1411 = scmp.le.s32.totalorder 2, %s17
      // Predicated region
      $region45: #{tpu_custom_call.1} parent=5 // pred_check
        %p1412 = pneg %p1411
      $region46: #{tpu_custom_call.1} parent=5 // pred_check_branch
        %1414 = sbr.rel (%p1412) target = $region48
      $region47: #{tpu_custom_call.1} parent=5 // pred_region
        %s1415 = ssub.s32 %s17, 2
        // Predicated region
        $region49: #{tpu_custom_call.1} parent=47 // pred_check
          %p1416 = pneg %p114
        $region50: #{tpu_custom_call.1} parent=47 // pred_check_branch
          %1418 = sbr.rel (%p1416) target = $region52
        $region51: #{tpu_custom_call.1} parent=47 // pred_region
          %s1419 = sand.u32 %s99, 1
          %s1420 = scalar_lea.sflag [#allocation5], %s1419
          %s1421 = sand.u32 %s99, 1
          %s1422 = smul.addr %s1421, 2
          %s1423 = scalar_lea.vmem [#allocation8], %s1422
          %1424 = dma.done %s1420, 32
        $region52: #{tpu_custom_call.1} parent=47 // pred_fallthru
          _
      $region48: #{tpu_custom_call.1} parent=5 // pred_fallthru
        _
    $region6: #{tpu_custom_call.1} parent=1 // loop_footer
      %s21 = sadd.s32 1, %s17
    $region7: #{tpu_custom_call.1} parent=1 // loop_footer_branch
      %16 = sbr.rel target = $region3
    $region8: #{tpu_custom_call.1} parent=1 // loop_exit
      _
    %1425 = vsyncpa [#allocation4], 1
    %s1426 = scalar_lea.sflag [#allocation4], 1
    %1427 = vsyncpa %s1426, 1
    %1428 = vsyncpa [#allocation7], 1
    %s1429 = scalar_lea.sflag [#allocation7], 1
    %1430 = vsyncpa %s1429, 1
    %1431 = vsyncpa [#allocation5], 1
    %s1432 = scalar_lea.sflag [#allocation5], 1
    %1433 = vsyncpa %s1432, 1

</llo_original>
